<compile_context>
chip_gen: v6e
topology: v6e:2x2x1
jax: 0.10.0
libtpu: 0.0.40
codegen_flags: <defaults>
</compile_context>

<pallas_src>
import numpy as np
import jax
import jax.numpy as jnp
from jax.experimental import pallas as pl
from jax.experimental.pallas import tpu as pltpu


# ----------------------------------------------------------------------------------
# Host-side constant builders (fold padding / stride / taps / bilinear into matmuls).
# ----------------------------------------------------------------------------------
def _bilinear_matrix(in_size, out_size):
    """(out_size, in_size) bilinear weights, PyTorch align_corners=False convention."""
    o = np.arange(out_size)
    src = (o + 0.5) * (in_size / out_size) - 0.5
    src = np.clip(src, 0.0, in_size - 1)
    i0 = np.clip(np.floor(src).astype(np.int64), 0, in_size - 1)
    i1 = np.minimum(i0 + 1, in_size - 1)
    w1 = (src - i0).astype(np.float32)
    w0 = (1.0 - w1).astype(np.float32)
    m = np.zeros((out_size, in_size), np.float32)
    m[o, i0] += w0
    m[o, i1] += w1
    return m


def _row_select_matrices(K, in_h, out_h, stride):
    """S[kh] (out_h, in_h): picks padded row stride*oh+kh (zero rows for the halo)."""
    pad = (K - 1) // 2
    mats = np.zeros((K, out_h, in_h), np.float32)
    for kh in range(K):
        for oh in range(out_h):
            ih = stride * oh + kh - pad
            if 0 <= ih < in_h:
                mats[kh, oh, ih] = 1.0
    return mats


def _conv_col_matrices(weight_hwio, in_w, out_w, stride):
    """M[kh] (in_w*Ci, out_w*Co): kw taps + column stride + zero pad folded in."""
    K, _, Ci, Co = weight_hwio.shape
    pad = (K - 1) // 2
    mats = np.zeros((K, in_w * Ci, out_w * Co), np.float32)
    for kh in range(K):
        for kw in range(K):
            for ow in range(out_w):
                iw = stride * ow + kw - pad
                if 0 <= iw < in_w:
                    mats[kh, iw * Ci:(iw + 1) * Ci, ow * Co:(ow + 1) * Co] = \
                        weight_hwio[kh, kw]
    return mats


def _gelu(x):
    # tanh-approximate GELU (matches jax.nn.gelu(approximate=True)); tanh -> EUP.
    c = 0.7978845608028654  # sqrt(2/pi)
    return 0.5 * x * (1.0 + jnp.tanh(c * (x + 0.044715 * x * x * x)))


# ----------------------------------------------------------------------------------
# Fused UnetBlock kernel.  One grid step == P lane-packed images in row-slab layout:
# rows on the sublane axis, (image, column, channel) flattened on the lane axis.
# All matmuls are bf16 x bf16 with f32 accumulation; GELU/bias math stays f32.
# ----------------------------------------------------------------------------------
def _unet_block_kernel(x_ref, sdown_ref, mdown_ref, bdown_ref, uwmup_ref,
                       rsup_ref, bup_ref, mx_ref, mm_ref, bcat_ref, o_ref):
    f32 = jnp.float32
    x = x_ref[0]                                   # (H, P*W*Cb)  bf16, lane-dense
    K = sdown_ref.shape[0]
    h = sdown_ref.shape[1]                         # stride-2 output rows
    H = rsup_ref.shape[1]                          # full-resolution rows
    wcd = mdown_ref.shape[1] // K                  # P*w*Cm  (down-conv lane width)
    wcu = uwmup_ref.shape[1] // K                  # P*W*Cm  (up-conv lane width)

    # ---- down: 3x3 stride-2 conv.  One fat column matmul over all taps, then K
    #      tiny row-select matmuls; bias folded into the accumulator init.
    big_d = jnp.dot(x, mdown_ref[...], preferred_element_type=f32)   # (H, K*wcd)
    acc_d = jnp.broadcast_to(bdown_ref[...], (h, wcd))
    for kh in range(K):
        acc_d = acc_d + jnp.dot(sdown_ref[kh],
                                big_d[:, kh * wcd:(kh + 1) * wcd],
                                preferred_element_type=f32)
    mid = _gelu(acc_d)                             # (h, P*w*Cm)  f32

    # ---- block: identity (NoneLayer)  [see TODO(synk) above]

    # ---- bilinear upsample + 3x3 stride-1 upconv.  Column half of the bilinear is
    #      pre-folded into uwmup (= uw @ mup[kh]); the row half is pre-folded into
    #      rsup.  Same fat-matmul-then-row-select structure as the down conv.
    big_u = jnp.dot(mid.astype(x.dtype), uwmup_ref[...],
                    preferred_element_type=f32)    # (h, K*wcu)
    acc_u = jnp.broadcast_to(bup_ref[...], (H, wcu))
    for kh in range(K):
        acc_u = acc_u + jnp.dot(rsup_ref[kh],
                                big_u[:, kh * wcu:(kh + 1) * wcu],
                                preferred_element_type=f32)
    mid_up = _gelu(acc_u)                          # (H, P*W*Cm)  f32

    # ---- catconv: 1x1 conv over concat([x, mid_up]) == two matmuls on the tiles
    #      already resident in vregs (x is read from HBM exactly once).
    out = (jnp.dot(x, mx_ref[...], preferred_element_type=f32)
           + jnp.dot(mid_up.astype(x.dtype), mm_ref[...], preferred_element_type=f32)
           + bcat_ref[...])                        # (H, P*W*Cout), lane-dense
    o_ref[0] = out.astype(o_ref.dtype)


# ----------------------------------------------------------------------------------
# Wrapper: NCHW in/out (PyTorch convention); layout glue is transpose/reshape only.
# ----------------------------------------------------------------------------------
def unet_block_forward(x_nchw, params):
    wd, bd = params["down_w"], params["down_b"]   # (3,3,Cb,Cm), (Cm,)   HWIO
    wu, bu = params["up_w"], params["up_b"]       # (3,3,Cm,Cm), (Cm,)
    wc, bc = params["cat_w"], params["cat_b"]     # (1,1,Cb+Cm,Cout), (Cout,)

    N, Cb, H, W = x_nchw.shape
    K = int(wd.shape[0])
    Cm = int(wd.shape[3])
    Cout = int(wc.shape[3])
    pad = (K - 1) // 2
    h = (H + 2 * pad - K) // 2 + 1                 # down-conv output height (stride 2)
    w = (W + 2 * pad - K) // 2 + 1

    # Lane-pack 2 images per grid step (makes every tile >=128 lanes wide).
    # NOTE(v7x): with exactly N=2 this leaves a single grid step (one TensorCore);
    # prefer P=1 there, or N>=4.  On single-TC v5e/v6e packing always wins.
    P = 2 if (N % 2 == 0) else 1

    wd_np = np.asarray(wd, np.float32)
    wu_np = np.asarray(wu, np.float32)
    wc_np = np.asarray(wc, np.float32)[0, 0]       # (Cb+Cm, Cout)
    bd_np = np.asarray(bd, np.float32)
    bu_np = np.asarray(bu, np.float32)
    bc_np = np.asarray(bc, np.float32)

    # Per-image banded matrices (padding / stride / kw taps / bilinear folded in).
    sdown = _row_select_matrices(K, H, h, 2)                        # (K, h, H)
    mdown = _conv_col_matrices(wd_np, W, w, 2)                      # (K, W*Cb, w*Cm)
    rh = _bilinear_matrix(h, H)                                     # (H, h)
    rw = _bilinear_matrix(w, W)                                     # (W, w)
    uw = np.kron(rw.T, np.eye(Cm, dtype=np.float32))                # (w*Cm, W*Cm)
    sup = _row_select_matrices(K, H, H, 1)                          # (K, H, H)
    rsup = np.einsum('kab,bc->kac', sup, rh).astype(np.float32)     # (K, H, h)
    mup = _conv_col_matrices(wu_np, W, W, 1)                        # (K, W*Cm, W*Cm)
    uwmup = np.einsum('ab,kbc->kac', uw, mup).astype(np.float32)    # (K, w*Cm, W*Cm)
    mx1 = np.kron(np.eye(W, dtype=np.float32), wc_np[:Cb])          # (W*Cb, W*Cout)
    mm1 = np.kron(np.eye(W, dtype=np.float32), wc_np[Cb:])          # (W*Cm, W*Cout)

    # Block-diagonal packing over P lane-packed images + tap concatenation.
    eyeP = np.eye(P, dtype=np.float32)
    def pack(a):
        return np.kron(eyeP, a)
    mdown_cat = np.concatenate([pack(mdown[kh]) for kh in range(K)], axis=1)
    uwmup_cat = np.concatenate([pack(uwmup[kh]) for kh in range(K)], axis=1)
    mx = pack(mx1)
    mm = pack(mm1)
    bdown = np.tile(np.tile(bd_np, w), P)[None, :]                  # (1, P*w*Cm)
    bup = np.tile(np.tile(bu_np, W), P)[None, :]                    # (1, P*W*Cm)
    bcat = np.tile(np.tile(bc_np, W), P)[None, :]                   # (1, P*W*Cout)

    # bf16 MXU operands (selection / identity / bilinear entries are exact in bf16,
    # conv weights lose <1e-3); biases stay f32 and all accumulation is f32.
    const_arrays = [
        jnp.asarray(sdown, jnp.float32),          # (K, h, H)      tiny, row selects
        jnp.asarray(mdown_cat, jnp.bfloat16),     # (P*W*Cb, K*P*w*Cm)
        jnp.asarray(bdown, jnp.float32),          # (1, P*w*Cm)
        jnp.asarray(uwmup_cat, jnp.bfloat16),     # (P*w*Cm, K*P*W*Cm)
        jnp.asarray(rsup, jnp.float32),           # (K, H, h)      tiny, row selects
        jnp.asarray(bup, jnp.float32),            # (1, P*W*Cm)
        jnp.asarray(mx, jnp.bfloat16),            # (P*W*Cb, P*W*Cout)
        jnp.asarray(mm, jnp.bfloat16),            # (P*W*Cm, P*W*Cout)
        jnp.asarray(bcat, jnp.float32),           # (1, P*W*Cout)
    ]

    # NCHW -> lane-packed row slab (N/P, H, P*W*Cb), bf16.
    x_slab = jnp.transpose(x_nchw, (0, 2, 3, 1)).reshape(N // P, P, H, W * Cb)
    x_slab = jnp.transpose(x_slab, (0, 2, 1, 3)).reshape(N // P, H, P * W * Cb)
    x_slab = x_slab.astype(jnp.bfloat16)

    # Cost estimate from the actual matmul plan.
    def mmf(m, k, n):
        return 2 * m * k * n
    steps = N // P
    step_flops = (mmf(H, P * W * Cb, K * P * w * Cm)       # x @ mdown_cat
                  + K * mmf(h, H, P * w * Cm)              # down row selects
                  + mmf(h, P * w * Cm, K * P * W * Cm)     # mid @ uwmup_cat
                  + K * mmf(H, h, P * W * Cm)              # up row selects
                  + mmf(H, P * W * Cb, P * W * Cout)       # x @ mx
                  + mmf(H, P * W * Cm, P * W * Cout))      # mid_up @ mm
    const_bytes = sum(int(c.size) * c.dtype.itemsize for c in const_arrays)
    out_itemsize = np.dtype(x_nchw.dtype).itemsize
    cost = pl.CostEstimate(
        flops=int(steps * step_flops),
        transcendentals=int(steps * (h * P * w * Cm + H * P * W * Cm)),
        bytes_accessed=int(x_slab.size * x_slab.dtype.itemsize
                           + N * H * W * Cout * out_itemsize + const_bytes))

    # VMEM limit derived from the resident footprint (double-buffered blocks + slack)
    # instead of a flat number; keeps "biggest tile that fits" portable to v7x (64MiB).
    block_bytes = (H * P * W * Cb * x_slab.dtype.itemsize
                   + H * P * W * Cout * out_itemsize + const_bytes)
    vmem_limit = int(min(100 * 2 ** 20, max(4 * 2 ** 20, 4 * block_bytes)))

    in_specs = [pl.BlockSpec((1, H, P * W * Cb), lambda n: (n, 0, 0))]
    # Constant operands: whole-array blocks with a constant index_map.  When scaling
    # H/W/C, single-buffer these (pipeline_mode=pl.Buffered(1) or DMA once to scratch)
    # to halve their VMEM footprint; at these shapes the doubled footprint is <1 MiB.
    in_specs += [pl.BlockSpec(tuple(c.shape), lambda n, nd=c.ndim: (0,) * nd)
                 for c in const_arrays]

    out_slab = pl.pallas_call(
        _unet_block_kernel,
        out_shape=jax.ShapeDtypeStruct((N // P, H, P * W * Cout), x_nchw.dtype),
        grid=(N // P,),
        in_specs=in_specs,
        out_specs=pl.BlockSpec((1, H, P * W * Cout), lambda n: (n, 0, 0)),
        compiler_params=pltpu.CompilerParams(
            dimension_semantics=("parallel",),          # megacore-shardable over steps
            vmem_limit_bytes=vmem_limit),
        cost_estimate=cost,
    )(x_slab, *const_arrays)

    # lane-packed row slab -> NCHW (layout glue only).
    out = out_slab.reshape(N // P, H, P, W, Cout)
    out = jnp.transpose(out, (0, 2, 4, 1, 3)).reshape(N, Cout, H, W)
    return out


# ----------------------------------------------------------------------------------
# Pure-JAX reference: independent ops (lax conv + jax.image.resize), same tanh-GELU.
# ----------------------------------------------------------------------------------
def unet_block_reference(x_nchw, params):
    wd, bd = params["down_w"], params["down_b"]
    wu, bu = params["up_w"], params["up_b"]
    wc, bc = params["cat_w"], params["cat_b"]
    N, Cb, H, W = x_nchw.shape
    x = jnp.transpose(x_nchw, (0, 2, 3, 1))

    def conv(v, wgt, b, stride, pad):
        y = jax.lax.conv_general_dilated(
            v, wgt, (stride, stride), padding=[(pad, pad), (pad, pad)],
            dimension_numbers=("NHWC", "HWIO", "NHWC"))
        return y + b

    mid = jax.nn.gelu(conv(x, wd, bd, 2, 1), approximate=True)
    # block = identity
    Cm = mid.shape[-1]
    # Independent bilinear parity check: jax.image.resize with half-pixel centers
    # matches F.interpolate(mode='bilinear', align_corners=False) for this upsample.
    ups = jax.image.resize(mid, (N, H, W, Cm), method="bilinear")
    mid_up = jax.nn.gelu(conv(ups, wu, bu, 1, 1), approximate=True)
    cat = jnp.concatenate([x, mid_up], axis=-1)
    out = conv(cat, wc, bc, 1, 0)
    return jnp.transpose(out, (0, 3, 1, 2))


if __name__ == "__main__":
    # Small shapes consistent with the module: batch=2, base_nc=4, m_nc=8, spatial=16.
    N, Cb, H, W = 2, 4, 16, 16
    Cm, Cout, K = 8, 4, 3

    key = jax.random.PRNGKey(0)
    kx, k1, k2, k3, k4, k5, k6 = jax.random.split(key, 7)

    def bf16_representable(a):
        # The kernel feeds the MXU bf16 operands (f32 accumulation); generating
        # bf16-representable test data keeps the f32 reference parity tight.
        return a.astype(jnp.bfloat16).astype(jnp.float32)

    x = bf16_representable(jax.random.normal(kx, (N, Cb, H, W), dtype=jnp.float32))

    def uinit(k, shape, fan_in):
        b = 1.0 / np.sqrt(fan_in)
        return jax.random.uniform(k, shape, jnp.float32, -b, b)

    params = {
        "down_w": bf16_representable(uinit(k1, (K, K, Cb, Cm), Cb * K * K)),  # HWIO
        "down_b": uinit(k2, (Cm,), Cb * K * K),
        "up_w":   bf16_representable(uinit(k3, (K, K, Cm, Cm), Cm * K * K)),
        "up_b":   uinit(k4, (Cm,), Cm * K * K),
        "cat_w":  bf16_representable(uinit(k5, (1, 1, Cb + Cm, Cout), Cb + Cm)),
        "cat_b":  uinit(k6, (Cout,), Cb + Cm),
    }

    out = jax.block_until_ready(unet_block_forward(x, params))
    ref = jax.block_until_ready(unet_block_reference(x, params))
    # Tolerance reflects bf16 MXU operands / bf16-rounded intermediates (f32 accum).
    np.testing.assert_allclose(np.asarray(out), np.asarray(ref), atol=2e-2, rtol=2e-2)

    print("KERNEL_OK")
</pallas_src>

<mosaic_0001>
module attributes {stable_mosaic.version = 11 : i64} {
  func.func @_unet_block_kernel(%arg0: i32, %arg1: memref<1x16x128xbf16, #tpu.memory_space<vmem>>, %arg2: memref<3x8x16xf32, #tpu.memory_space<vmem>>, %arg3: memref<128x384xbf16, #tpu.memory_space<vmem>>, %arg4: memref<1x128xf32, #tpu.memory_space<vmem>>, %arg5: memref<128x768xbf16, #tpu.memory_space<vmem>>, %arg6: memref<3x16x8xf32, #tpu.memory_space<vmem>>, %arg7: memref<1x256xf32, #tpu.memory_space<vmem>>, %arg8: memref<128x128xbf16, #tpu.memory_space<vmem>>, %arg9: memref<256x128xbf16, #tpu.memory_space<vmem>>, %arg10: memref<1x128xf32, #tpu.memory_space<vmem>>, %arg11: memref<1x16x128xf32, #tpu.memory_space<vmem>>) attributes {dimension_semantics = [#tpu.dimension_semantics<parallel>], iteration_bounds = array<i64: 1>, scalar_prefetch = 0 : i64, scratch_operands = 0 : i64, tpu.core_type = #tpu.core_type<tc>, window_params = [{transform_indices = @transform_0, window_bounds = array<i64: 1, 16, 128>}, {pipeline_mode = #tpu.pipeline_mode<synchronous>, transform_indices = @transform_1, window_bounds = array<i64: 3, 8, 16>}, {pipeline_mode = #tpu.pipeline_mode<synchronous>, transform_indices = @transform_2, window_bounds = array<i64: 128, 384>}, {pipeline_mode = #tpu.pipeline_mode<synchronous>, transform_indices = @transform_3, window_bounds = array<i64: 1, 128>}, {pipeline_mode = #tpu.pipeline_mode<synchronous>, transform_indices = @transform_4, window_bounds = array<i64: 128, 768>}, {pipeline_mode = #tpu.pipeline_mode<synchronous>, transform_indices = @transform_5, window_bounds = array<i64: 3, 16, 8>}, {pipeline_mode = #tpu.pipeline_mode<synchronous>, transform_indices = @transform_6, window_bounds = array<i64: 1, 256>}, {pipeline_mode = #tpu.pipeline_mode<synchronous>, transform_indices = @transform_7, window_bounds = array<i64: 128, 128>}, {pipeline_mode = #tpu.pipeline_mode<synchronous>, transform_indices = @transform_8, window_bounds = array<i64: 256, 128>}, {pipeline_mode = #tpu.pipeline_mode<synchronous>, transform_indices = @transform_9, window_bounds = array<i64: 1, 128>}, {transform_indices = @transform_10, window_bounds = array<i64: 1, 16, 128>}]} {
    %c0 = arith.constant 0 : index
    %c0_0 = arith.constant 0 : index
    %c0_1 = arith.constant 0 : index
    %0 = vector.load %arg1[%c0, %c0_0, %c0_1] : memref<1x16x128xbf16, #tpu.memory_space<vmem>>, vector<1x16x128xbf16>
    %1 = vector.shape_cast %0 : vector<1x16x128xbf16> to vector<16x128xbf16>
    %c0_2 = arith.constant 0 : index
    %c0_3 = arith.constant 0 : index
    %2 = vector.load %arg3[%c0_2, %c0_3] : memref<128x384xbf16, #tpu.memory_space<vmem>>, vector<128x384xbf16>
    %cst = arith.constant dense<0.000000e+00> : vector<16x384xf32>
    %3 = tpu.matmul %1, %2, %cst {dimension_numbers = #tpu.dot_dimension_numbers<[1], [0], [0], [1], [0, 0, 1, 1], [], []>} : vector<16x128xbf16>, vector<128x384xbf16>, vector<16x384xf32> -> vector<16x384xf32>
    %c0_4 = arith.constant 0 : index
    %c0_5 = arith.constant 0 : index
    %4 = vector.load %arg4[%c0_4, %c0_5] : memref<1x128xf32, #tpu.memory_space<vmem>>, vector<1x128xf32>
    %5 = vector.shape_cast %4 : vector<1x128xf32> to vector<1x128xf32>
    %6 = vector.broadcast %5 : vector<1x128xf32> to vector<8x128xf32>
    %c0_6 = arith.constant 0 : index
    %c0_7 = arith.constant 0 : index
    %c0_8 = arith.constant 0 : index
    %7 = vector.load %arg2[%c0_6, %c0_7, %c0_8] : memref<3x8x16xf32, #tpu.memory_space<vmem>>, vector<1x8x16xf32>
    %8 = vector.shape_cast %7 : vector<1x8x16xf32> to vector<8x16xf32>
    %9 = vector.extract_strided_slice %3 {offsets = [0, 0], sizes = [16, 128], strides = [1, 1]} : vector<16x384xf32> to vector<16x128xf32>
    %cst_9 = arith.constant dense<0.000000e+00> : vector<8x128xf32>
    %10 = tpu.matmul %8, %9, %cst_9 {dimension_numbers = #tpu.dot_dimension_numbers<[1], [0], [0], [1], [0, 0, 1, 1], [], []>} : vector<8x16xf32>, vector<16x128xf32>, vector<8x128xf32> -> vector<8x128xf32>
    %11 = arith.addf %6, %10 : vector<8x128xf32>
    %c1 = arith.constant 1 : index
    %c0_10 = arith.constant 0 : index
    %c0_11 = arith.constant 0 : index
    %12 = vector.load %arg2[%c1, %c0_10, %c0_11] : memref<3x8x16xf32, #tpu.memory_space<vmem>>, vector<1x8x16xf32>
    %13 = vector.shape_cast %12 : vector<1x8x16xf32> to vector<8x16xf32>
    %14 = vector.extract_strided_slice %3 {offsets = [0, 128], sizes = [16, 128], strides = [1, 1]} : vector<16x384xf32> to vector<16x128xf32>
    %cst_12 = arith.constant dense<0.000000e+00> : vector<8x128xf32>
    %15 = tpu.matmul %13, %14, %cst_12 {dimension_numbers = #tpu.dot_dimension_numbers<[1], [0], [0], [1], [0, 0, 1, 1], [], []>} : vector<8x16xf32>, vector<16x128xf32>, vector<8x128xf32> -> vector<8x128xf32>
    %16 = arith.addf %11, %15 : vector<8x128xf32>
    %c2 = arith.constant 2 : index
    %c0_13 = arith.constant 0 : index
    %c0_14 = arith.constant 0 : index
    %17 = vector.load %arg2[%c2, %c0_13, %c0_14] : memref<3x8x16xf32, #tpu.memory_space<vmem>>, vector<1x8x16xf32>
    %18 = vector.shape_cast %17 : vector<1x8x16xf32> to vector<8x16xf32>
    %19 = vector.extract_strided_slice %3 {offsets = [0, 256], sizes = [16, 128], strides = [1, 1]} : vector<16x384xf32> to vector<16x128xf32>
    %cst_15 = arith.constant dense<0.000000e+00> : vector<8x128xf32>
    %20 = tpu.matmul %18, %19, %cst_15 {dimension_numbers = #tpu.dot_dimension_numbers<[1], [0], [0], [1], [0, 0, 1, 1], [], []>} : vector<8x16xf32>, vector<16x128xf32>, vector<8x128xf32> -> vector<8x128xf32>
    %21 = arith.addf %16, %20 : vector<8x128xf32>
    %cst_16 = arith.constant 5.000000e-01 : f32
    %22 = vector.broadcast %cst_16 : f32 to vector<8x128xf32>
    %23 = arith.mulf %22, %21 : vector<8x128xf32>
    %cst_17 = arith.constant 4.471500e-02 : f32
    %24 = vector.broadcast %cst_17 : f32 to vector<8x128xf32>
    %25 = arith.mulf %24, %21 : vector<8x128xf32>
    %26 = arith.mulf %25, %21 : vector<8x128xf32>
    %27 = arith.mulf %26, %21 : vector<8x128xf32>
    %28 = arith.addf %21, %27 : vector<8x128xf32>
    %cst_18 = arith.constant 0.797884583 : f32
    %29 = vector.broadcast %cst_18 : f32 to vector<8x128xf32>
    %30 = arith.mulf %29, %28 : vector<8x128xf32>
    %31 = math.tanh %30 : vector<8x128xf32>
    %cst_19 = arith.constant 1.000000e+00 : f32
    %32 = vector.broadcast %cst_19 : f32 to vector<8x128xf32>
    %33 = arith.addf %32, %31 : vector<8x128xf32>
    %34 = arith.mulf %23, %33 : vector<8x128xf32>
    %35 = arith.truncf %34 : vector<8x128xf32> to vector<8x128xbf16>
    %c0_20 = arith.constant 0 : index
    %c0_21 = arith.constant 0 : index
    %36 = vector.load %arg5[%c0_20, %c0_21] : memref<128x768xbf16, #tpu.memory_space<vmem>>, vector<128x768xbf16>
    %cst_22 = arith.constant dense<0.000000e+00> : vector<8x768xf32>
    %37 = tpu.matmul %35, %36, %cst_22 {dimension_numbers = #tpu.dot_dimension_numbers<[1], [0], [0], [1], [0, 0, 1, 1], [], []>} : vector<8x128xbf16>, vector<128x768xbf16>, vector<8x768xf32> -> vector<8x768xf32>
    %c0_23 = arith.constant 0 : index
    %c0_24 = arith.constant 0 : index
    %38 = vector.load %arg7[%c0_23, %c0_24] : memref<1x256xf32, #tpu.memory_space<vmem>>, vector<1x256xf32>
    %39 = vector.shape_cast %38 : vector<1x256xf32> to vector<1x256xf32>
    %40 = vector.broadcast %39 : vector<1x256xf32> to vector<16x256xf32>
    %c0_25 = arith.constant 0 : index
    %c0_26 = arith.constant 0 : index
    %c0_27 = arith.constant 0 : index
    %41 = vector.load %arg6[%c0_25, %c0_26, %c0_27] : memref<3x16x8xf32, #tpu.memory_space<vmem>>, vector<1x16x8xf32>
    %42 = vector.shape_cast %41 : vector<1x16x8xf32> to vector<16x8xf32>
    %43 = vector.extract_strided_slice %37 {offsets = [0, 0], sizes = [8, 256], strides = [1, 1]} : vector<8x768xf32> to vector<8x256xf32>
    %cst_28 = arith.constant dense<0.000000e+00> : vector<16x256xf32>
    %44 = tpu.matmul %42, %43, %cst_28 {dimension_numbers = #tpu.dot_dimension_numbers<[1], [0], [0], [1], [0, 0, 1, 1], [], []>} : vector<16x8xf32>, vector<8x256xf32>, vector<16x256xf32> -> vector<16x256xf32>
    %45 = arith.addf %40, %44 : vector<16x256xf32>
    %c1_29 = arith.constant 1 : index
    %c0_30 = arith.constant 0 : index
    %c0_31 = arith.constant 0 : index
    %46 = vector.load %arg6[%c1_29, %c0_30, %c0_31] : memref<3x16x8xf32, #tpu.memory_space<vmem>>, vector<1x16x8xf32>
    %47 = vector.shape_cast %46 : vector<1x16x8xf32> to vector<16x8xf32>
    %48 = vector.extract_strided_slice %37 {offsets = [0, 256], sizes = [8, 256], strides = [1, 1]} : vector<8x768xf32> to vector<8x256xf32>
    %cst_32 = arith.constant dense<0.000000e+00> : vector<16x256xf32>
    %49 = tpu.matmul %47, %48, %cst_32 {dimension_numbers = #tpu.dot_dimension_numbers<[1], [0], [0], [1], [0, 0, 1, 1], [], []>} : vector<16x8xf32>, vector<8x256xf32>, vector<16x256xf32> -> vector<16x256xf32>
    %50 = arith.addf %45, %49 : vector<16x256xf32>
    %c2_33 = arith.constant 2 : index
    %c0_34 = arith.constant 0 : index
    %c0_35 = arith.constant 0 : index
    %51 = vector.load %arg6[%c2_33, %c0_34, %c0_35] : memref<3x16x8xf32, #tpu.memory_space<vmem>>, vector<1x16x8xf32>
    %52 = vector.shape_cast %51 : vector<1x16x8xf32> to vector<16x8xf32>
    %53 = vector.extract_strided_slice %37 {offsets = [0, 512], sizes = [8, 256], strides = [1, 1]} : vector<8x768xf32> to vector<8x256xf32>
    %cst_36 = arith.constant dense<0.000000e+00> : vector<16x256xf32>
    %54 = tpu.matmul %52, %53, %cst_36 {dimension_numbers = #tpu.dot_dimension_numbers<[1], [0], [0], [1], [0, 0, 1, 1], [], []>} : vector<16x8xf32>, vector<8x256xf32>, vector<16x256xf32> -> vector<16x256xf32>
    %55 = arith.addf %50, %54 : vector<16x256xf32>
    %cst_37 = arith.constant 5.000000e-01 : f32
    %56 = vector.broadcast %cst_37 : f32 to vector<16x256xf32>
    %57 = arith.mulf %56, %55 : vector<16x256xf32>
    %cst_38 = arith.constant 4.471500e-02 : f32
    %58 = vector.broadcast %cst_38 : f32 to vector<16x256xf32>
    %59 = arith.mulf %58, %55 : vector<16x256xf32>
    %60 = arith.mulf %59, %55 : vector<16x256xf32>
    %61 = arith.mulf %60, %55 : vector<16x256xf32>
    %62 = arith.addf %55, %61 : vector<16x256xf32>
    %cst_39 = arith.constant 0.797884583 : f32
    %63 = vector.broadcast %cst_39 : f32 to vector<16x256xf32>
    %64 = arith.mulf %63, %62 : vector<16x256xf32>
    %65 = math.tanh %64 : vector<16x256xf32>
    %cst_40 = arith.constant 1.000000e+00 : f32
    %66 = vector.broadcast %cst_40 : f32 to vector<16x256xf32>
    %67 = arith.addf %66, %65 : vector<16x256xf32>
    %68 = arith.mulf %57, %67 : vector<16x256xf32>
    %c0_41 = arith.constant 0 : index
    %c0_42 = arith.constant 0 : index
    %69 = vector.load %arg8[%c0_41, %c0_42] : memref<128x128xbf16, #tpu.memory_space<vmem>>, vector<128x128xbf16>
    %cst_43 = arith.constant dense<0.000000e+00> : vector<16x128xf32>
    %70 = tpu.matmul %1, %69, %cst_43 {dimension_numbers = #tpu.dot_dimension_numbers<[1], [0], [0], [1], [0, 0, 1, 1], [], []>} : vector<16x128xbf16>, vector<128x128xbf16>, vector<16x128xf32> -> vector<16x128xf32>
    %71 = arith.truncf %68 : vector<16x256xf32> to vector<16x256xbf16>
    %c0_44 = arith.constant 0 : index
    %c0_45 = arith.constant 0 : index
    %72 = vector.load %arg9[%c0_44, %c0_45] : memref<256x128xbf16, #tpu.memory_space<vmem>>, vector<256x128xbf16>
    %cst_46 = arith.constant dense<0.000000e+00> : vector<16x128xf32>
    %73 = tpu.matmul %71, %72, %cst_46 {dimension_numbers = #tpu.dot_dimension_numbers<[1], [0], [0], [1], [0, 0, 1, 1], [], []>} : vector<16x256xbf16>, vector<256x128xbf16>, vector<16x128xf32> -> vector<16x128xf32>
    %74 = arith.addf %70, %73 : vector<16x128xf32>
    %c0_47 = arith.constant 0 : index
    %c0_48 = arith.constant 0 : index
    %75 = vector.load %arg10[%c0_47, %c0_48] : memref<1x128xf32, #tpu.memory_space<vmem>>, vector<1x128xf32>
    %76 = vector.broadcast %75 : vector<1x128xf32> to vector<16x128xf32>
    %77 = arith.addf %74, %76 : vector<16x128xf32>
    %c0_49 = arith.constant 0 : index
    %c0_50 = arith.constant 0 : index
    %c0_51 = arith.constant 0 : index
    %78 = vector.load %arg11[%c0_49, %c0_50, %c0_51] : memref<1x16x128xf32, #tpu.memory_space<vmem>>, vector<1x16x128xf32>
    %79 = vector.shape_cast %78 : vector<1x16x128xf32> to vector<16x128xf32>
    %80 = vector.shape_cast %77 : vector<16x128xf32> to vector<1x16x128xf32>
    tpu.vector_store %arg11[%c0_49, %c0_50, %c0_51], %80 {strides = array<i32>} : memref<1x16x128xf32, #tpu.memory_space<vmem>>, vector<1x16x128xf32>,
    return
  }
  func.func @transform_0(%arg0: i32) -> (i32, i32, i32) {
    %c0_i32 = arith.constant 0 : i32
    %c0_i32_0 = arith.constant 0 : i32
    %c0_i32_1 = arith.constant 0 : i32
    return %arg0, %c0_i32, %c0_i32_0 : i32, i32, i32
  }
  func.func @transform_1(%arg0: i32) -> (i32, i32, i32) {
    %c0_i32 = arith.constant 0 : i32
    %c0_i32_0 = arith.constant 0 : i32
    %c0_i32_1 = arith.constant 0 : i32
    %c0_i32_2 = arith.constant 0 : i32
    return %c0_i32, %c0_i32_0, %c0_i32_1 : i32, i32, i32
  }
  func.func @transform_2(%arg0: i32) -> (i32, i32) {
    %c0_i32 = arith.constant 0 : i32
    %c0_i32_0 = arith.constant 0 : i32
    %c0_i32_1 = arith.constant 0 : i32
    return %c0_i32, %c0_i32_0 : i32, i32
  }
  func.func @transform_3(%arg0: i32) -> (i32, i32) {
    %c0_i32 = arith.constant 0 : i32
    %c0_i32_0 = arith.constant 0 : i32
    %c0_i32_1 = arith.constant 0 : i32
    return %c0_i32, %c0_i32_0 : i32, i32
  }
  func.func @transform_4(%arg0: i32) -> (i32, i32) {
    %c0_i32 = arith.constant 0 : i32
    %c0_i32_0 = arith.constant 0 : i32
    %c0_i32_1 = arith.constant 0 : i32
    return %c0_i32, %c0_i32_0 : i32, i32
  }
  func.func @transform_5(%arg0: i32) -> (i32, i32, i32) {
    %c0_i32 = arith.constant 0 : i32
    %c0_i32_0 = arith.constant 0 : i32
    %c0_i32_1 = arith.constant 0 : i32
    %c0_i32_2 = arith.constant 0 : i32
    return %c0_i32, %c0_i32_0, %c0_i32_1 : i32, i32, i32
  }
  func.func @transform_6(%arg0: i32) -> (i32, i32) {
    %c0_i32 = arith.constant 0 : i32
    %c0_i32_0 = arith.constant 0 : i32
    %c0_i32_1 = arith.constant 0 : i32
    return %c0_i32, %c0_i32_0 : i32, i32
  }
  func.func @transform_7(%arg0: i32) -> (i32, i32) {
    %c0_i32 = arith.constant 0 : i32
    %c0_i32_0 = arith.constant 0 : i32
    %c0_i32_1 = arith.constant 0 : i32
    return %c0_i32, %c0_i32_0 : i32, i32
  }
  func.func @transform_8(%arg0: i32) -> (i32, i32) {
    %c0_i32 = arith.constant 0 : i32
    %c0_i32_0 = arith.constant 0 : i32
    %c0_i32_1 = arith.constant 0 : i32
    return %c0_i32, %c0_i32_0 : i32, i32
  }
  func.func @transform_9(%arg0: i32) -> (i32, i32) {
    %c0_i32 = arith.constant 0 : i32
    %c0_i32_0 = arith.constant 0 : i32
    %c0_i32_1 = arith.constant 0 : i32
    return %c0_i32, %c0_i32_0 : i32, i32
  }
  func.func @transform_10(%arg0: i32) -> (i32, i32, i32) {
    %c0_i32 = arith.constant 0 : i32
    %c0_i32_0 = arith.constant 0 : i32
    %c0_i32_1 = arith.constant 0 : i32
    return %arg0, %c0_i32, %c0_i32_0 : i32, i32, i32
  }
}

</mosaic_0001>

<llo_original>
// kernel: tpu_custom_call.1
$region0: #{tpu_custom_call.1}
  #allocation0 [shape = 'u32[]', space=smem, size = 0x4, offset = 0x4, fixed_abs, tag = 'smem constant byte address 0x4 - core index']
  #allocation1 [shape = 'u32[144,128]{1,0:T(1,128)}', space=vmem, size = 0x12000, scoped, tag = 'internal scratch']
  %s0 = inlined_call_operand.vmem [shape: bf16[1,16,128], index: 0, kind: input, shape index: {}]
  %s1 = inlined_call_operand.hbm [shape: f32[3,8,16], index: 1, kind: input, shape index: {}]
  %s2 = inlined_call_operand.hbm [shape: bf16[128,384], index: 2, kind: input, shape index: {}]
  %s3 = inlined_call_operand.vmem [shape: f32[1,128], index: 3, kind: input, shape index: {}]
  %s4 = inlined_call_operand.hbm [shape: bf16[128,768], index: 4, kind: input, shape index: {}]
  %s5 = inlined_call_operand.vmem [shape: f32[3,16,8], index: 5, kind: input, shape index: {}]
  %s6 = inlined_call_operand.vmem [shape: f32[1,256], index: 6, kind: input, shape index: {}]
  %s7 = inlined_call_operand.vmem [shape: bf16[128,128], index: 7, kind: input, shape index: {}]
  %s8 = inlined_call_operand.hbm [shape: bf16[256,128], index: 8, kind: input, shape index: {}]
  %s9 = inlined_call_operand.vmem [shape: f32[1,128], index: 9, kind: input, shape index: {}]
  %s10 = inlined_call_operand.hbm [shape: f32[1,16,128], index: 10, kind: output, shape index: {}]
  %s11 = sld [smem:[#allocation0]]
  $region66: #{tpu_custom_call.1} parent=0
    _
  %s13 = ssub.s32 1, %s11
  %s14 = scalar_select 0, %s13, %s11
  $region1: #{tpu_custom_call.1} parent=0
    #allocation2 [shape = 'u8[12288]{0}', space=vmem, size = 0x3000, scoped, tag = 'input window, operand 1, single buffered']
    #allocation3 [shape = 's32[1]{0}', space=sflag, size = 0x4, scoped, tag = 'scoped memory for tpu_custom_call.1']
    #allocation4 [shape = 's32[1]{0}', space=sflag, size = 0x4, scoped, tag = 'scoped memory for tpu_custom_call.1']
    #allocation5 [shape = 'u8[98304]{0}', space=vmem, size = 0x18000, scoped, tag = 'input window, operand 2, single buffered']
    #allocation6 [shape = 's32[1]{0}', space=sflag, size = 0x4, scoped, tag = 'scoped memory for tpu_custom_call.1']
    #allocation7 [shape = 'u8[196608]{0}', space=vmem, size = 0x30000, scoped, tag = 'input window, operand 4, single buffered']
    #allocation8 [shape = 'u8[65536]{0}', space=vmem, size = 0x10000, scoped, tag = 'input window, operand 8, single buffered']
    #allocation9 [shape = 's32[1]{0}', space=sflag, size = 0x4, scoped, tag = 'scoped memory for tpu_custom_call.1']
    #allocation10 [shape = 'u8[8192]{0}', space=vmem, size = 0x2000, scoped, tag = 'output window, operand 0, single buffered']
    %15 = vsyncpa [#allocation3], 0
    %16 = vsyncpa [#allocation6], 0
    %17 = vsyncpa [#allocation9], 0
    %18 = vsyncpa [#allocation4], 0
    // Predicated region
    $region2: #{tpu_custom_call.1} parent=1 // pred_check
      _
    $region3: #{tpu_custom_call.1} parent=1 // pred_check_branch
      %20 = sbr.rel (0) target = $region5
    $region4: #{tpu_custom_call.1} parent=1 // pred_region
      _
    $region5: #{tpu_custom_call.1} parent=1 // pred_fallthru
      _
    // Predicated region
    $region6: #{tpu_custom_call.1} parent=1 // pred_check
      _
    $region7: #{tpu_custom_call.1} parent=1 // pred_check_branch
      %22 = sbr.rel (0) target = $region9
    $region8: #{tpu_custom_call.1} parent=1 // pred_region
      %s24 = ssub.s32 384, 384
      %25 = vsyncadd [#allocation3], %s24
      %s26 = sshll.u32 [#allocation2], 4
      %s27 = int_to_ptr.vmem [resolvable:$true] %s26
      %32 = dma.hbm_to_vmem [thread:$0]  %s1, 384, %s27, [#allocation3], 128, 128, 8
    $region9: #{tpu_custom_call.1} parent=1 // pred_fallthru
      _
    // Predicated region
    $region10: #{tpu_custom_call.1} parent=1 // pred_check
      _
    $region11: #{tpu_custom_call.1} parent=1 // pred_check_branch
      %34 = sbr.rel (0) target = $region13
    $region12: #{tpu_custom_call.1} parent=1 // pred_region
      %s36 = ssub.s32 3072, 3072
      %37 = vsyncadd [#allocation6], %s36
      %s38 = sshll.u32 [#allocation5], 4
      %s39 = int_to_ptr.vmem [resolvable:$true] %s38
      %44 = dma.hbm_to_vmem [thread:$0]  %s2, 3072, %s39, [#allocation6], 192, 192, 12
    $region13: #{tpu_custom_call.1} parent=1 // pred_fallthru
      _
    // Predicated region
    $region14: #{tpu_custom_call.1} parent=1 // pred_check
      _
    $region15: #{tpu_custom_call.1} parent=1 // pred_check_branch
      %46 = sbr.rel (0) target = $region17
    $region16: #{tpu_custom_call.1} parent=1 // pred_region
      _
    $region17: #{tpu_custom_call.1} parent=1 // pred_fallthru
      _
    // Predicated region
    $region18: #{tpu_custom_call.1} parent=1 // pred_check
      _
    $region19: #{tpu_custom_call.1} parent=1 // pred_check_branch
      %48 = sbr.rel (0) target = $region21
    $region20: #{tpu_custom_call.1} parent=1 // pred_region
      %s50 = ssub.s32 6144, 6144
      %51 = vsyncadd [#allocation6], %s50
      %s52 = sshll.u32 [#allocation7], 4
      %s53 = int_to_ptr.vmem [resolvable:$true] %s52
      %58 = dma.hbm_to_vmem [thread:$0]  %s4, 6144, %s53, [#allocation6], 384, 384, 24
    $region21: #{tpu_custom_call.1} parent=1 // pred_fallthru
      _
    // Predicated region
    $region22: #{tpu_custom_call.1} parent=1 // pred_check
      _
    $region23: #{tpu_custom_call.1} parent=1 // pred_check_branch
      %60 = sbr.rel (0) target = $region25
    $region24: #{tpu_custom_call.1} parent=1 // pred_region
      _
    $region25: #{tpu_custom_call.1} parent=1 // pred_fallthru
      _
    // Predicated region
    $region26: #{tpu_custom_call.1} parent=1 // pred_check
      _
    $region27: #{tpu_custom_call.1} parent=1 // pred_check_branch
      %62 = sbr.rel (0) target = $region29
    $region28: #{tpu_custom_call.1} parent=1 // pred_region
      _
    $region29: #{tpu_custom_call.1} parent=1 // pred_fallthru
      _
    // Predicated region
    $region30: #{tpu_custom_call.1} parent=1 // pred_check
      _
    $region31: #{tpu_custom_call.1} parent=1 // pred_check_branch
      %64 = sbr.rel (0) target = $region33
    $region32: #{tpu_custom_call.1} parent=1 // pred_region
      _
    $region33: #{tpu_custom_call.1} parent=1 // pred_fallthru
      _
    // Predicated region
    $region34: #{tpu_custom_call.1} parent=1 // pred_check
      _
    $region35: #{tpu_custom_call.1} parent=1 // pred_check_branch
      %66 = sbr.rel (0) target = $region37
    $region36: #{tpu_custom_call.1} parent=1 // pred_region
      %s68 = ssub.s32 2048, 2048
      %69 = vsyncadd [#allocation9], %s68
      %s70 = sshll.u32 [#allocation8], 4
      %s71 = int_to_ptr.vmem [resolvable:$true] %s70
      %76 = dma.hbm_to_vmem [thread:$0]  %s8, 2048, %s71, [#allocation9], 64, 64, 4
    $region37: #{tpu_custom_call.1} parent=1 // pred_fallthru
      _
    // Predicated region
    $region38: #{tpu_custom_call.1} parent=1 // pred_check
      _
    $region39: #{tpu_custom_call.1} parent=1 // pred_check_branch
      %78 = sbr.rel (0) target = $region41
    $region40: #{tpu_custom_call.1} parent=1 // pred_region
      _
    $region41: #{tpu_custom_call.1} parent=1 // pred_fallthru
      _
    // Predicated region
    $region42: #{tpu_custom_call.1} parent=1 // pred_check
      _
    $region43: #{tpu_custom_call.1} parent=1 // pred_check_branch
      %80 = sbr.rel (0) target = $region45
    $region44: #{tpu_custom_call.1} parent=1 // pred_region
      %81 = dma.done [#allocation3], 384
    $region45: #{tpu_custom_call.1} parent=1 // pred_fallthru
      _
    // Predicated region
    $region46: #{tpu_custom_call.1} parent=1 // pred_check
      _
    $region47: #{tpu_custom_call.1} parent=1 // pred_check_branch
      %83 = sbr.rel (0) target = $region49
    $region48: #{tpu_custom_call.1} parent=1 // pred_region
      %84 = dma.done [#allocation6], 3072
    $region49: #{tpu_custom_call.1} parent=1 // pred_fallthru
      _
    // Predicated region
    $region50: #{tpu_custom_call.1} parent=1 // pred_check
      _
    $region51: #{tpu_custom_call.1} parent=1 // pred_check_branch
      %86 = sbr.rel (0) target = $region53
    $region52: #{tpu_custom_call.1} parent=1 // pred_region
      %87 = dma.done [#allocation6], 6144
    $region53: #{tpu_custom_call.1} parent=1 // pred_fallthru
      _
    // Predicated region
    $region54: #{tpu_custom_call.1} parent=1 // pred_check
      _
    $region55: #{tpu_custom_call.1} parent=1 // pred_check_branch
      %89 = sbr.rel (0) target = $region57
    $region56: #{tpu_custom_call.1} parent=1 // pred_region
      %90 = dma.done [#allocation9], 2048
    $region57: #{tpu_custom_call.1} parent=1 // pred_fallthru
      _
    %v92 = vld [vmem:[%s0] sm:$0xf]
    %v93 = vld [vmem:[%s0 + $0x4] sm:$0xf]
    %v94 = vld [vmem:[#allocation5] sm:$0xff]
    %v95 = vld [vmem:[#allocation5 + $0x8] sm:$0xf]
    %v96 = vld [vmem:[#allocation5 + $0xc] sm:$0xff]
    %v97 = vld [vmem:[#allocation5 + $0x14] sm:$0xf]
    %v98 = vld [vmem:[#allocation5 + $0x18] sm:$0xff]
    %v99 = vld [vmem:[#allocation5 + $0x20] sm:$0xf]
    %v100 = vld [vmem:[#allocation5 + $0x24] sm:$0xff]
    %v101 = vld [vmem:[#allocation5 + $0x2c] sm:$0xf]
    %v102 = vld [vmem:[#allocation5 + $0x30] sm:$0xff]
    %v103 = vld [vmem:[#allocation5 + $0x38] sm:$0xf]
    %v104 = vld [vmem:[#allocation5 + $0x3c] sm:$0xff]
    %v105 = vld [vmem:[#allocation5 + $0x44] sm:$0xf]
    %v106 = vld [vmem:[#allocation5 + $0x48] sm:$0xff]
    %v107 = vld [vmem:[#allocation5 + $0x50] sm:$0xf]
    %v108 = vld [vmem:[#allocation5 + $0x54] sm:$0xff]
    %v109 = vld [vmem:[#allocation5 + $0x5c] sm:$0xf]
    %v110 = vld [vmem:[#allocation5 + $0x60] sm:$0xff]
    %v111 = vld [vmem:[#allocation5 + $0x68] sm:$0xf]
    %v112 = vld [vmem:[#allocation5 + $0x6c] sm:$0xff]
    %v113 = vld [vmem:[#allocation5 + $0x74] sm:$0xf]
    %v114 = vld [vmem:[#allocation5 + $0x78] sm:$0xff]
    %v115 = vld [vmem:[#allocation5 + $0x80] sm:$0xf]
    %v116 = vld [vmem:[#allocation5 + $0x84] sm:$0xff]
    %v117 = vld [vmem:[#allocation5 + $0x8c] sm:$0xf]
    %v118 = vld [vmem:[#allocation5 + $0x90] sm:$0xff]
    %v119 = vld [vmem:[#allocation5 + $0x98] sm:$0xf]
    %v120 = vld [vmem:[#allocation5 + $0x9c] sm:$0xff]
    %v121 = vld [vmem:[#allocation5 + $0xa4] sm:$0xf]
    %v122 = vld [vmem:[#allocation5 + $0xa8] sm:$0xff]
    %v123 = vld [vmem:[#allocation5 + $0xb0] sm:$0xf]
    %v124 = vld [vmem:[#allocation5 + $0xb4] sm:$0xff]
    %v125 = vld [vmem:[#allocation5 + $0xbc] sm:$0xf]
    %v128 = vunpack.c.l.b16 %v92
    %v129 = vunpack.c.l.b16 %v93
    %v130 = vpack.c.b16 %v129, %v128
    %v164 = vunpack.c.l.b16 %v94
    %v165 = vunpack.c.h.b16 %v94
    %v166 = vunpack.c.l.b16 %v95
    %v167 = vunpack.c.l.b16 %v96
    %v168 = vunpack.c.h.b16 %v96
    %v169 = vunpack.c.l.b16 %v97
    %v170 = vunpack.c.l.b16 %v98
    %v171 = vunpack.c.h.b16 %v98
    %v172 = vunpack.c.l.b16 %v99
    %v173 = vunpack.c.l.b16 %v100
    %v174 = vunpack.c.h.b16 %v100
    %v175 = vunpack.c.l.b16 %v101
    %v176 = vunpack.c.l.b16 %v102
    %v177 = vunpack.c.h.b16 %v102
    %v178 = vunpack.c.l.b16 %v103
    %v179 = vunpack.c.l.b16 %v104
    %v180 = vunpack.c.h.b16 %v104
    %v181 = vunpack.c.l.b16 %v105
    %v182 = vunpack.c.l.b16 %v106
    %v183 = vunpack.c.h.b16 %v106
    %v184 = vunpack.c.l.b16 %v107
    %v185 = vunpack.c.l.b16 %v108
    %v186 = vunpack.c.h.b16 %v108
    %v187 = vunpack.c.l.b16 %v109
    %v188 = vunpack.c.l.b16 %v110
    %v189 = vunpack.c.h.b16 %v110
    %v190 = vunpack.c.l.b16 %v111
    %v191 = vunpack.c.l.b16 %v112
    %v192 = vunpack.c.h.b16 %v112
    %v193 = vunpack.c.l.b16 %v113
    %v194 = vunpack.c.l.b16 %v114
    %v195 = vunpack.c.h.b16 %v114
    %v196 = vunpack.c.l.b16 %v115
    %v197 = vunpack.c.l.b16 %v116
    %v198 = vunpack.c.h.b16 %v116
    %v199 = vunpack.c.l.b16 %v117
    %v200 = vunpack.c.l.b16 %v118
    %v201 = vunpack.c.h.b16 %v118
    %v202 = vunpack.c.l.b16 %v119
    %v203 = vunpack.c.l.b16 %v120
    %v204 = vunpack.c.h.b16 %v120
    %v205 = vunpack.c.l.b16 %v121
    %v206 = vunpack.c.l.b16 %v122
    %v207 = vunpack.c.h.b16 %v122
    %v208 = vunpack.c.l.b16 %v123
    %v209 = vunpack.c.l.b16 %v124
    %v210 = vunpack.c.h.b16 %v124
    %v211 = vunpack.c.l.b16 %v125
    %v212 = vpack.c.b16 %v167, %v164
    %v213 = vpack.c.b16 %v168, %v165
    %v214 = vpack.c.b16 %v169, %v166
    %v215 = vpack.c.b16 %v173, %v170
    %v216 = vpack.c.b16 %v174, %v171
    %v217 = vpack.c.b16 %v175, %v172
    %v218 = vpack.c.b16 %v179, %v176
    %v219 = vpack.c.b16 %v180, %v177
    %v220 = vpack.c.b16 %v181, %v178
    %v221 = vpack.c.b16 %v185, %v182
    %v222 = vpack.c.b16 %v186, %v183
    %v223 = vpack.c.b16 %v187, %v184
    %v224 = vpack.c.b16 %v191, %v188
    %v225 = vpack.c.b16 %v192, %v189
    %v226 = vpack.c.b16 %v193, %v190
    %v227 = vpack.c.b16 %v197, %v194
    %v228 = vpack.c.b16 %v198, %v195
    %v229 = vpack.c.b16 %v199, %v196
    %v230 = vpack.c.b16 %v203, %v200
    %v231 = vpack.c.b16 %v204, %v201
    %v232 = vpack.c.b16 %v205, %v202
    %v233 = vpack.c.b16 %v209, %v206
    %v234 = vpack.c.b16 %v210, %v207
    %v235 = vpack.c.b16 %v211, %v208
    %260 = vmatprep.subr.bf16.mxu0 %v234
    %261 = vmatpush1.bf16.msra.mxu0 %v233
    %262 = vmatprep.subr.bf16.mxu0 %v231
    %263 = vmatpush1.bf16.msra.mxu0 %v230
    %264 = vmatprep.subr.bf16.mxu0 %v228
    %265 = vmatpush1.bf16.msra.mxu0 %v227
    %266 = vmatprep.subr.bf16.mxu0 %v225
    %267 = vmatpush1.bf16.msra.mxu0 %v224
    %268 = vmatprep.subr.bf16.mxu0 %v222
    %269 = vmatpush1.bf16.msra.mxu0 %v221
    %270 = vmatprep.subr.bf16.mxu0 %v219
    %271 = vmatpush1.bf16.msra.mxu0 %v218
    %272 = vmatprep.subr.bf16.mxu0 %v216
    %273 = vmatpush1.bf16.msra.mxu0 %v215
    %274 = vmatprep.subr.bf16.mxu0 %v213
    %275 = vmatpush1.bf16.msra.mxu0 %v212
    %276 = vmatprep.subr.bf16.mxu0 0
    %277 = vmatpush2.bf16.msra.mxu0 0
    %278 = vmatprep.subr.bf16.mxu0 0
    %279 = vmatpush2.bf16.msra.mxu0 0
    %280 = vmatprep.subr.bf16.mxu0 0
    %281 = vmatpush2.bf16.msra.mxu0 0
    %282 = vmatprep.subr.bf16.mxu0 0
    %283 = vmatpush2.bf16.msra.mxu0 0
    %284 = vmatprep.subr.bf16.mxu0 0
    %285 = vmatpush2.bf16.msra.mxu0 0
    %286 = vmatprep.subr.bf16.mxu0 0
    %287 = vmatpush2.bf16.msra.mxu0 0
    %288 = vmatprep.subr.bf16.mxu0 0
    %289 = vmatpush2.bf16.msra.mxu0 0
    %290 = vmatprep.subr.bf16.mxu0 0
    %291 = vmatpush2.bf16.msra.mxu0 0
    %292 = vmatprep.mubr.bf16.mxu0 0
    %293 = vmatmul.mubr.bf16.gmra.mxu0 %v130
    %v294 = vpop.f32.mrf.mxu0
    %v295 = vadd.f32 0.0, %v294
    %v296 = vpop.f32.mrf.mxu0
    %v297 = vadd.f32 0.0, %v296
    %v298 = vpop.f32.mrf.mxu0
    %v299 = vadd.f32 0.0, %v298
    %v300 = vpop.f32.mrf.mxu0
    %v301 = vadd.f32 0.0, %v300
    %302 = vdwg.mxu0
    %303 = vmatprep.subr.bf16.mxu0 0
    %304 = vmatpush1.bf16.msra.mxu0 %v235
    %305 = vmatprep.subr.bf16.mxu0 0
    %306 = vmatpush1.bf16.msra.mxu0 %v232
    %307 = vmatprep.subr.bf16.mxu0 0
    %308 = vmatpush1.bf16.msra.mxu0 %v229
    %309 = vmatprep.subr.bf16.mxu0 0
    %310 = vmatpush1.bf16.msra.mxu0 %v226
    %311 = vmatprep.subr.bf16.mxu0 0
    %312 = vmatpush1.bf16.msra.mxu0 %v223
    %313 = vmatprep.subr.bf16.mxu0 0
    %314 = vmatpush1.bf16.msra.mxu0 %v220
    %315 = vmatprep.subr.bf16.mxu0 0
    %316 = vmatpush1.bf16.msra.mxu0 %v217
    %317 = vmatprep.subr.bf16.mxu0 0
    %318 = vmatpush1.bf16.msra.mxu0 %v214
    %319 = vmatprep.subr.bf16.mxu0 0
    %320 = vmatpush2.bf16.msra.mxu0 0
    %321 = vmatprep.subr.bf16.mxu0 0
    %322 = vmatpush2.bf16.msra.mxu0 0
    %323 = vmatprep.subr.bf16.mxu0 0
    %324 = vmatpush2.bf16.msra.mxu0 0
    %325 = vmatprep.subr.bf16.mxu0 0
    %326 = vmatpush2.bf16.msra.mxu0 0
    %327 = vmatprep.subr.bf16.mxu0 0
    %328 = vmatpush2.bf16.msra.mxu0 0
    %329 = vmatprep.subr.bf16.mxu0 0
    %330 = vmatpush2.bf16.msra.mxu0 0
    %331 = vmatprep.subr.bf16.mxu0 0
    %332 = vmatpush2.bf16.msra.mxu0 0
    %333 = vmatprep.subr.bf16.mxu0 0
    %334 = vmatpush2.bf16.msra.mxu0 0
    %335 = vmatprep.mubr.bf16.mxu0 0
    %336 = vmatmul.mubr.bf16.gmra.mxu0 %v130
    %v337 = vpop.f32.mrf.mxu0
    %v338 = vadd.f32 0.0, %v337
    %v339 = vpop.f32.mrf.mxu0
    %v340 = vpop.f32.mrf.mxu0
    %v341 = vadd.f32 0.0, %v340
    %v342 = vpop.f32.mrf.mxu0
    %343 = vdwg.mxu0
    %v344 = vld [vmem:[%s3] sm:$0x1]
    %v346 = vlaneseq
    %v347 = vshrl.u32 %v346, 7
    %v348 = vsub.s32 0, %v347
    %v349 = vrot.slane %v344, %v348
    %v351 = vld [vmem:[#allocation2] sm:$0xff]
    %vm352 = vcmask 130048
    %v354 = vsel %vm352, %v351, 0
    %356 = vmatprep.subr.mxu0 0.0
    %357 = vmatpush1.msra.mxu0 0.0
    %358 = vmatprep.subr.mxu0 0.0
    %359 = vmatpush1.msra.mxu0 0.0
    %360 = vmatprep.subr.mxu0 0.0
    %361 = vmatpush1.msra.mxu0 0.0
    %362 = vmatprep.subr.mxu0 0.0
    %363 = vmatpush1.msra.mxu0 0.0
    %364 = vmatprep.subr.mxu0 0.0
    %365 = vmatpush1.msra.mxu0 0.0
    %366 = vmatprep.subr.mxu0 0.0
    %367 = vmatpush1.msra.mxu0 0.0
    %368 = vmatprep.subr.mxu0 0.0
    %369 = vmatpush1.msra.mxu0 0.0
    %370 = vmatprep.subr.mxu0 0.0
    %371 = vmatpush1.msra.mxu0 0.0
    %372 = vmatprep.subr.mxu0 0.0
    %373 = vmatpush1.msra.mxu0 0.0
    %374 = vmatprep.subr.mxu0 0.0
    %375 = vmatpush1.msra.mxu0 0.0
    %376 = vmatprep.subr.mxu0 0.0
    %377 = vmatpush1.msra.mxu0 0.0
    %378 = vmatprep.subr.mxu0 0.0
    %379 = vmatpush1.msra.mxu0 0.0
    %380 = vmatprep.subr.mxu0 0.0
    %381 = vmatpush1.msra.mxu0 0.0
    %382 = vmatprep.subr.mxu0 0.0
    %383 = vmatpush1.msra.mxu0 0.0
    %384 = vmatprep.subr.mxu0 0.0
    %385 = vmatpush1.msra.mxu0 %v299
    %386 = vmatprep.subr.mxu0 0.0
    %387 = vmatpush1.msra.mxu0 %v295
    %388 = vmatprep.subr.mxu0 0.0
    %389 = vmatpush2.msra.mxu0 0.0
    %390 = vmatprep.subr.mxu0 0.0
    %391 = vmatpush2.msra.mxu0 0.0
    %392 = vmatprep.subr.mxu0 0.0
    %393 = vmatpush2.msra.mxu0 0.0
    %394 = vmatprep.subr.mxu0 0.0
    %395 = vmatpush2.msra.mxu0 0.0
    %396 = vmatprep.subr.mxu0 0.0
    %397 = vmatpush2.msra.mxu0 0.0
    %398 = vmatprep.subr.mxu0 0.0
    %399 = vmatpush2.msra.mxu0 0.0
    %400 = vmatprep.subr.mxu0 0.0
    %401 = vmatpush2.msra.mxu0 0.0
    %402 = vmatprep.subr.mxu0 0.0
    %403 = vmatpush2.msra.mxu0 0.0
    %404 = vmatprep.subr.mxu0 0.0
    %405 = vmatpush2.msra.mxu0 0.0
    %406 = vmatprep.subr.mxu0 0.0
    %407 = vmatpush2.msra.mxu0 0.0
    %408 = vmatprep.subr.mxu0 0.0
    %409 = vmatpush2.msra.mxu0 0.0
    %410 = vmatprep.subr.mxu0 0.0
    %411 = vmatpush2.msra.mxu0 0.0
    %412 = vmatprep.subr.mxu0 0.0
    %413 = vmatpush2.msra.mxu0 0.0
    %414 = vmatprep.subr.mxu0 0.0
    %415 = vmatpush2.msra.mxu0 0.0
    %416 = vmatprep.subr.mxu0 0.0
    %417 = vmatpush2.msra.mxu0 0.0
    %418 = vmatprep.subr.mxu0 0.0
    %419 = vmatpush2.msra.mxu0 0.0
    %420 = vmatprep.mubr.f32.mxu0 0.0
    %421 = vmatmul.mubr.f32.gmra.mxu0 %v354
    %v422 = vpop.f32.mrf.mxu0
    %v423 = vadd.f32 0.0, %v422
    %v424 = vpop.f32.mrf.mxu0
    %425 = vdwg.mxu0
    %v426 = vadd.f32 %v349, %v423
    %s427 = scalar_lea.vmem [#allocation2], 8
    %v428 = vld [vmem:[%s427] sm:$0xff]
    %v430 = vsel %vm352, %v428, 0
    %432 = vmatprep.subr.mxu0 0.0
    %433 = vmatpush1.msra.mxu0 0.0
    %434 = vmatprep.subr.mxu0 0.0
    %435 = vmatpush1.msra.mxu0 0.0
    %436 = vmatprep.subr.mxu0 0.0
    %437 = vmatpush1.msra.mxu0 0.0
    %438 = vmatprep.subr.mxu0 0.0
    %439 = vmatpush1.msra.mxu0 0.0
    %440 = vmatprep.subr.mxu0 0.0
    %441 = vmatpush1.msra.mxu0 0.0
    %442 = vmatprep.subr.mxu0 0.0
    %443 = vmatpush1.msra.mxu0 0.0
    %444 = vmatprep.subr.mxu0 0.0
    %445 = vmatpush1.msra.mxu0 0.0
    %446 = vmatprep.subr.mxu0 0.0
    %447 = vmatpush1.msra.mxu0 0.0
    %448 = vmatprep.subr.mxu0 0.0
    %449 = vmatpush1.msra.mxu0 0.0
    %450 = vmatprep.subr.mxu0 0.0
    %451 = vmatpush1.msra.mxu0 0.0
    %452 = vmatprep.subr.mxu0 0.0
    %453 = vmatpush1.msra.mxu0 0.0
    %454 = vmatprep.subr.mxu0 0.0
    %455 = vmatpush1.msra.mxu0 0.0
    %456 = vmatprep.subr.mxu0 0.0
    %457 = vmatpush1.msra.mxu0 0.0
    %458 = vmatprep.subr.mxu0 0.0
    %459 = vmatpush1.msra.mxu0 0.0
    %460 = vmatprep.subr.mxu0 0.0
    %461 = vmatpush1.msra.mxu0 %v301
    %462 = vmatprep.subr.mxu0 0.0
    %463 = vmatpush1.msra.mxu0 %v297
    %464 = vmatprep.subr.mxu0 0.0
    %465 = vmatpush2.msra.mxu0 0.0
    %466 = vmatprep.subr.mxu0 0.0
    %467 = vmatpush2.msra.mxu0 0.0
    %468 = vmatprep.subr.mxu0 0.0
    %469 = vmatpush2.msra.mxu0 0.0
    %470 = vmatprep.subr.mxu0 0.0
    %471 = vmatpush2.msra.mxu0 0.0
    %472 = vmatprep.subr.mxu0 0.0
    %473 = vmatpush2.msra.mxu0 0.0
    %474 = vmatprep.subr.mxu0 0.0
    %475 = vmatpush2.msra.mxu0 0.0
    %476 = vmatprep.subr.mxu0 0.0
    %477 = vmatpush2.msra.mxu0 0.0
    %478 = vmatprep.subr.mxu0 0.0
    %479 = vmatpush2.msra.mxu0 0.0
    %480 = vmatprep.subr.mxu0 0.0
    %481 = vmatpush2.msra.mxu0 0.0
    %482 = vmatprep.subr.mxu0 0.0
    %483 = vmatpush2.msra.mxu0 0.0
    %484 = vmatprep.subr.mxu0 0.0
    %485 = vmatpush2.msra.mxu0 0.0
    %486 = vmatprep.subr.mxu0 0.0
    %487 = vmatpush2.msra.mxu0 0.0
    %488 = vmatprep.subr.mxu0 0.0
    %489 = vmatpush2.msra.mxu0 0.0
    %490 = vmatprep.subr.mxu0 0.0
    %491 = vmatpush2.msra.mxu0 0.0
    %492 = vmatprep.subr.mxu0 0.0
    %493 = vmatpush2.msra.mxu0 0.0
    %494 = vmatprep.subr.mxu0 0.0
    %495 = vmatpush2.msra.mxu0 0.0
    %496 = vmatprep.mubr.f32.mxu0 0.0
    %497 = vmatmul.mubr.f32.gmra.mxu0 %v430
    %v498 = vpop.f32.mrf.mxu0
    %v499 = vadd.f32 0.0, %v498
    %v500 = vpop.f32.mrf.mxu0
    %501 = vdwg.mxu0
    %v502 = vadd.f32 %v426, %v499
    %s503 = scalar_lea.vmem [#allocation2], 16
    %v504 = vld [vmem:[%s503] sm:$0xff]
    %v506 = vsel %vm352, %v504, 0
    %508 = vmatprep.subr.mxu0 0.0
    %509 = vmatpush1.msra.mxu0 0.0
    %510 = vmatprep.subr.mxu0 0.0
    %511 = vmatpush1.msra.mxu0 0.0
    %512 = vmatprep.subr.mxu0 0.0
    %513 = vmatpush1.msra.mxu0 0.0
    %514 = vmatprep.subr.mxu0 0.0
    %515 = vmatpush1.msra.mxu0 0.0
    %516 = vmatprep.subr.mxu0 0.0
    %517 = vmatpush1.msra.mxu0 0.0
    %518 = vmatprep.subr.mxu0 0.0
    %519 = vmatpush1.msra.mxu0 0.0
    %520 = vmatprep.subr.mxu0 0.0
    %521 = vmatpush1.msra.mxu0 0.0
    %522 = vmatprep.subr.mxu0 0.0
    %523 = vmatpush1.msra.mxu0 0.0
    %524 = vmatprep.subr.mxu0 0.0
    %525 = vmatpush1.msra.mxu0 0.0
    %526 = vmatprep.subr.mxu0 0.0
    %527 = vmatpush1.msra.mxu0 0.0
    %528 = vmatprep.subr.mxu0 0.0
    %529 = vmatpush1.msra.mxu0 0.0
    %530 = vmatprep.subr.mxu0 0.0
    %531 = vmatpush1.msra.mxu0 0.0
    %532 = vmatprep.subr.mxu0 0.0
    %533 = vmatpush1.msra.mxu0 0.0
    %534 = vmatprep.subr.mxu0 0.0
    %535 = vmatpush1.msra.mxu0 0.0
    %536 = vmatprep.subr.mxu0 0.0
    %537 = vmatpush1.msra.mxu0 %v341
    %538 = vmatprep.subr.mxu0 0.0
    %539 = vmatpush1.msra.mxu0 %v338
    %540 = vmatprep.subr.mxu0 0.0
    %541 = vmatpush2.msra.mxu0 0.0
    %542 = vmatprep.subr.mxu0 0.0
    %543 = vmatpush2.msra.mxu0 0.0
    %544 = vmatprep.subr.mxu0 0.0
    %545 = vmatpush2.msra.mxu0 0.0
    %546 = vmatprep.subr.mxu0 0.0
    %547 = vmatpush2.msra.mxu0 0.0
    %548 = vmatprep.subr.mxu0 0.0
    %549 = vmatpush2.msra.mxu0 0.0
    %550 = vmatprep.subr.mxu0 0.0
    %551 = vmatpush2.msra.mxu0 0.0
    %552 = vmatprep.subr.mxu0 0.0
    %553 = vmatpush2.msra.mxu0 0.0
    %554 = vmatprep.subr.mxu0 0.0
    %555 = vmatpush2.msra.mxu0 0.0
    %556 = vmatprep.subr.mxu0 0.0
    %557 = vmatpush2.msra.mxu0 0.0
    %558 = vmatprep.subr.mxu0 0.0
    %559 = vmatpush2.msra.mxu0 0.0
    %560 = vmatprep.subr.mxu0 0.0
    %561 = vmatpush2.msra.mxu0 0.0
    %562 = vmatprep.subr.mxu0 0.0
    %563 = vmatpush2.msra.mxu0 0.0
    %564 = vmatprep.subr.mxu0 0.0
    %565 = vmatpush2.msra.mxu0 0.0
    %566 = vmatprep.subr.mxu0 0.0
    %567 = vmatpush2.msra.mxu0 0.0
    %568 = vmatprep.subr.mxu0 0.0
    %569 = vmatpush2.msra.mxu0 0.0
    %570 = vmatprep.subr.mxu0 0.0
    %571 = vmatpush2.msra.mxu0 0.0
    %572 = vmatprep.mubr.f32.mxu0 0.0
    %573 = vmatmul.mubr.f32.gmra.mxu0 %v506
    %v574 = vpop.f32.mrf.mxu0
    %v575 = vadd.f32 0.0, %v574
    %v576 = vpop.f32.mrf.mxu0
    %577 = vdwg.mxu0
    %v578 = vadd.f32 %v502, %v575
    %v579 = vmul.f32 %v578, 0.5
    %v580 = vmul.f32 %v578, 0.044715
    %v581 = vmul.f32 %v580, %v578
    %v582 = vmul.f32 %v581, %v578
    %v583 = vadd.f32 %v578, %v582
    %v584 = vmul.f32 %v583, 0.7978846
    %v585 = vtanh.pop %v584
    %v586 = vadd.f32 %v585, 1.0
    %v587 = vmul.f32 %v579, %v586
    %v588 = vpack.c.bf16 %v587, %v587
    %v589 = vld [vmem:[#allocation7] sm:$0xff]
    %v590 = vld [vmem:[#allocation7 + $0x8] sm:$0xff]
    %v591 = vld [vmem:[#allocation7 + $0x10] sm:$0xff]
    %v592 = vld [vmem:[#allocation7 + $0x18] sm:$0xff]
    %v593 = vld [vmem:[#allocation7 + $0x20] sm:$0xff]
    %v594 = vld [vmem:[#allocation7 + $0x28] sm:$0xff]
    %v595 = vld [vmem:[#allocation7 + $0x30] sm:$0xff]
    %v596 = vld [vmem:[#allocation7 + $0x38] sm:$0xff]
    %v597 = vld [vmem:[#allocation7 + $0x40] sm:$0xff]
    %v598 = vld [vmem:[#allocation7 + $0x48] sm:$0xff]
    %v599 = vld [vmem:[#allocation7 + $0x50] sm:$0xff]
    %v600 = vld [vmem:[#allocation7 + $0x58] sm:$0xff]
    %v601 = vld [vmem:[#allocation7 + $0x60] sm:$0xff]
    %v602 = vld [vmem:[#allocation7 + $0x68] sm:$0xff]
    %v603 = vld [vmem:[#allocation7 + $0x70] sm:$0xff]
    %v604 = vld [vmem:[#allocation7 + $0x78] sm:$0xff]
    %v605 = vld [vmem:[#allocation7 + $0x80] sm:$0xff]
    %v606 = vld [vmem:[#allocation7 + $0x88] sm:$0xff]
    %v607 = vld [vmem:[#allocation7 + $0x90] sm:$0xff]
    %v608 = vld [vmem:[#allocation7 + $0x98] sm:$0xff]
    %v609 = vld [vmem:[#allocation7 + $0xa0] sm:$0xff]
    %v610 = vld [vmem:[#allocation7 + $0xa8] sm:$0xff]
    %v611 = vld [vmem:[#allocation7 + $0xb0] sm:$0xff]
    %v612 = vld [vmem:[#allocation7 + $0xb8] sm:$0xff]
    %v613 = vld [vmem:[#allocation7 + $0xc0] sm:$0xff]
    %v614 = vld [vmem:[#allocation7 + $0xc8] sm:$0xff]
    %v615 = vld [vmem:[#allocation7 + $0xd0] sm:$0xff]
    %v616 = vld [vmem:[#allocation7 + $0xd8] sm:$0xff]
    %v617 = vld [vmem:[#allocation7 + $0xe0] sm:$0xff]
    %v618 = vld [vmem:[#allocation7 + $0xe8] sm:$0xff]
    %v619 = vld [vmem:[#allocation7 + $0xf0] sm:$0xff]
    %v620 = vld [vmem:[#allocation7 + $0xf8] sm:$0xff]
    %v621 = vld [vmem:[#allocation7 + $0x100] sm:$0xff]
    %v622 = vld [vmem:[#allocation7 + $0x108] sm:$0xff]
    %v623 = vld [vmem:[#allocation7 + $0x110] sm:$0xff]
    %v624 = vld [vmem:[#allocation7 + $0x118] sm:$0xff]
    %v625 = vld [vmem:[#allocation7 + $0x120] sm:$0xff]
    %v626 = vld [vmem:[#allocation7 + $0x128] sm:$0xff]
    %v627 = vld [vmem:[#allocation7 + $0x130] sm:$0xff]
    %v628 = vld [vmem:[#allocation7 + $0x138] sm:$0xff]
    %v629 = vld [vmem:[#allocation7 + $0x140] sm:$0xff]
    %v630 = vld [vmem:[#allocation7 + $0x148] sm:$0xff]
    %v631 = vld [vmem:[#allocation7 + $0x150] sm:$0xff]
    %v632 = vld [vmem:[#allocation7 + $0x158] sm:$0xff]
    %v633 = vld [vmem:[#allocation7 + $0x160] sm:$0xff]
    %v634 = vld [vmem:[#allocation7 + $0x168] sm:$0xff]
    %v635 = vld [vmem:[#allocation7 + $0x170] sm:$0xff]
    %v636 = vld [vmem:[#allocation7 + $0x178] sm:$0xff]
    %v685 = vunpack.c.l.b16 %v589
    %v686 = vunpack.c.h.b16 %v589
    %v687 = vunpack.c.l.b16 %v590
    %v688 = vunpack.c.h.b16 %v590
    %v689 = vunpack.c.l.b16 %v591
    %v690 = vunpack.c.h.b16 %v591
    %v691 = vunpack.c.l.b16 %v592
    %v692 = vunpack.c.h.b16 %v592
    %v693 = vunpack.c.l.b16 %v593
    %v694 = vunpack.c.h.b16 %v593
    %v695 = vunpack.c.l.b16 %v594
    %v696 = vunpack.c.h.b16 %v594
    %v697 = vunpack.c.l.b16 %v595
    %v698 = vunpack.c.h.b16 %v595
    %v699 = vunpack.c.l.b16 %v596
    %v700 = vunpack.c.h.b16 %v596
    %v701 = vunpack.c.l.b16 %v597
    %v702 = vunpack.c.h.b16 %v597
    %v703 = vunpack.c.l.b16 %v598
    %v704 = vunpack.c.h.b16 %v598
    %v705 = vunpack.c.l.b16 %v599
    %v706 = vunpack.c.h.b16 %v599
    %v707 = vunpack.c.l.b16 %v600
    %v708 = vunpack.c.h.b16 %v600
    %v709 = vunpack.c.l.b16 %v601
    %v710 = vunpack.c.h.b16 %v601
    %v711 = vunpack.c.l.b16 %v602
    %v712 = vunpack.c.h.b16 %v602
    %v713 = vunpack.c.l.b16 %v603
    %v714 = vunpack.c.h.b16 %v603
    %v715 = vunpack.c.l.b16 %v604
    %v716 = vunpack.c.h.b16 %v604
    %v717 = vunpack.c.l.b16 %v605
    %v718 = vunpack.c.h.b16 %v605
    %v719 = vunpack.c.l.b16 %v606
    %v720 = vunpack.c.h.b16 %v606
    %v721 = vunpack.c.l.b16 %v607
    %v722 = vunpack.c.h.b16 %v607
    %v723 = vunpack.c.l.b16 %v608
    %v724 = vunpack.c.h.b16 %v608
    %v725 = vunpack.c.l.b16 %v609
    %v726 = vunpack.c.h.b16 %v609
    %v727 = vunpack.c.l.b16 %v610
    %v728 = vunpack.c.h.b16 %v610
    %v729 = vunpack.c.l.b16 %v611
    %v730 = vunpack.c.h.b16 %v611
    %v731 = vunpack.c.l.b16 %v612
    %v732 = vunpack.c.h.b16 %v612
    %v733 = vunpack.c.l.b16 %v613
    %v734 = vunpack.c.h.b16 %v613
    %v735 = vunpack.c.l.b16 %v614
    %v736 = vunpack.c.h.b16 %v614
    %v737 = vunpack.c.l.b16 %v615
    %v738 = vunpack.c.h.b16 %v615
    %v739 = vunpack.c.l.b16 %v616
    %v740 = vunpack.c.h.b16 %v616
    %v741 = vunpack.c.l.b16 %v617
    %v742 = vunpack.c.h.b16 %v617
    %v743 = vunpack.c.l.b16 %v618
    %v744 = vunpack.c.h.b16 %v618
    %v745 = vunpack.c.l.b16 %v619
    %v746 = vunpack.c.h.b16 %v619
    %v747 = vunpack.c.l.b16 %v620
    %v748 = vunpack.c.h.b16 %v620
    %v749 = vunpack.c.l.b16 %v621
    %v750 = vunpack.c.h.b16 %v621
    %v751 = vunpack.c.l.b16 %v622
    %v752 = vunpack.c.h.b16 %v622
    %v753 = vunpack.c.l.b16 %v623
    %v754 = vunpack.c.h.b16 %v623
    %v755 = vunpack.c.l.b16 %v624
    %v756 = vunpack.c.h.b16 %v624
    %v757 = vunpack.c.l.b16 %v625
    %v758 = vunpack.c.h.b16 %v625
    %v759 = vunpack.c.l.b16 %v626
    %v760 = vunpack.c.h.b16 %v626
    %v761 = vunpack.c.l.b16 %v627
    %v762 = vunpack.c.h.b16 %v627
    %v763 = vunpack.c.l.b16 %v628
    %v764 = vunpack.c.h.b16 %v628
    %v765 = vunpack.c.l.b16 %v629
    %v766 = vunpack.c.h.b16 %v629
    %v767 = vunpack.c.l.b16 %v630
    %v768 = vunpack.c.h.b16 %v630
    %v769 = vunpack.c.l.b16 %v631
    %v770 = vunpack.c.h.b16 %v631
    %v771 = vunpack.c.l.b16 %v632
    %v772 = vunpack.c.h.b16 %v632
    %v773 = vunpack.c.l.b16 %v633
    %v774 = vunpack.c.h.b16 %v633
    %v775 = vunpack.c.l.b16 %v634
    %v776 = vunpack.c.h.b16 %v634
    %v777 = vunpack.c.l.b16 %v635
    %v778 = vunpack.c.h.b16 %v635
    %v779 = vunpack.c.l.b16 %v636
    %v780 = vunpack.c.h.b16 %v636
    %v781 = vpack.c.b16 %v691, %v685
    %v782 = vpack.c.b16 %v692, %v686
    %v783 = vpack.c.b16 %v693, %v687
    %v784 = vpack.c.b16 %v694, %v688
    %v785 = vpack.c.b16 %v695, %v689
    %v786 = vpack.c.b16 %v696, %v690
    %v787 = vpack.c.b16 %v703, %v697
    %v788 = vpack.c.b16 %v704, %v698
    %v789 = vpack.c.b16 %v705, %v699
    %v790 = vpack.c.b16 %v706, %v700
    %v791 = vpack.c.b16 %v707, %v701
    %v792 = vpack.c.b16 %v708, %v702
    %v793 = vpack.c.b16 %v715, %v709
    %v794 = vpack.c.b16 %v716, %v710
    %v795 = vpack.c.b16 %v717, %v711
    %v796 = vpack.c.b16 %v718, %v712
    %v797 = vpack.c.b16 %v719, %v713
    %v798 = vpack.c.b16 %v720, %v714
    %v799 = vpack.c.b16 %v727, %v721
    %v800 = vpack.c.b16 %v728, %v722
    %v801 = vpack.c.b16 %v729, %v723
    %v802 = vpack.c.b16 %v730, %v724
    %v803 = vpack.c.b16 %v731, %v725
    %v804 = vpack.c.b16 %v732, %v726
    %v805 = vpack.c.b16 %v739, %v733
    %v806 = vpack.c.b16 %v740, %v734
    %v807 = vpack.c.b16 %v741, %v735
    %v808 = vpack.c.b16 %v742, %v736
    %v809 = vpack.c.b16 %v743, %v737
    %v810 = vpack.c.b16 %v744, %v738
    %v811 = vpack.c.b16 %v751, %v745
    %v812 = vpack.c.b16 %v752, %v746
    %v813 = vpack.c.b16 %v753, %v747
    %v814 = vpack.c.b16 %v754, %v748
    %v815 = vpack.c.b16 %v755, %v749
    %v816 = vpack.c.b16 %v756, %v750
    %v817 = vpack.c.b16 %v763, %v757
    %v818 = vpack.c.b16 %v764, %v758
    %v819 = vpack.c.b16 %v765, %v759
    %v820 = vpack.c.b16 %v766, %v760
    %v821 = vpack.c.b16 %v767, %v761
    %v822 = vpack.c.b16 %v768, %v762
    %v823 = vpack.c.b16 %v775, %v769
    %v824 = vpack.c.b16 %v776, %v770
    %v825 = vpack.c.b16 %v777, %v771
    %v826 = vpack.c.b16 %v778, %v772
    %v827 = vpack.c.b16 %v779, %v773
    %v828 = vpack.c.b16 %v780, %v774
    %877 = vmatprep.subr.bf16.mxu0 %v824
    %878 = vmatpush1.bf16.msra.mxu0 %v823
    %879 = vmatprep.subr.bf16.mxu0 %v818
    %880 = vmatpush1.bf16.msra.mxu0 %v817
    %881 = vmatprep.subr.bf16.mxu0 %v812
    %882 = vmatpush1.bf16.msra.mxu0 %v811
    %883 = vmatprep.subr.bf16.mxu0 %v806
    %884 = vmatpush1.bf16.msra.mxu0 %v805
    %885 = vmatprep.subr.bf16.mxu0 %v800
    %886 = vmatpush1.bf16.msra.mxu0 %v799
    %887 = vmatprep.subr.bf16.mxu0 %v794
    %888 = vmatpush1.bf16.msra.mxu0 %v793
    %889 = vmatprep.subr.bf16.mxu0 %v788
    %890 = vmatpush1.bf16.msra.mxu0 %v787
    %891 = vmatprep.subr.bf16.mxu0 %v782
    %892 = vmatpush1.bf16.msra.mxu0 %v781
    %893 = vmatprep.subr.bf16.mxu0 0
    %894 = vmatpush2.bf16.msra.mxu0 0
    %895 = vmatprep.subr.bf16.mxu0 0
    %896 = vmatpush2.bf16.msra.mxu0 0
    %897 = vmatprep.subr.bf16.mxu0 0
    %898 = vmatpush2.bf16.msra.mxu0 0
    %899 = vmatprep.subr.bf16.mxu0 0
    %900 = vmatpush2.bf16.msra.mxu0 0
    %901 = vmatprep.subr.bf16.mxu0 0
    %902 = vmatpush2.bf16.msra.mxu0 0
    %903 = vmatprep.subr.bf16.mxu0 0
    %904 = vmatpush2.bf16.msra.mxu0 0
    %905 = vmatprep.subr.bf16.mxu0 0
    %906 = vmatpush2.bf16.msra.mxu0 0
    %907 = vmatprep.subr.bf16.mxu0 0
    %908 = vmatpush2.bf16.msra.mxu0 0
    %909 = vmatprep.mubr.bf16.mxu0 0
    %910 = vmatmul.mubr.bf16.gmra.mxu0 %v588
    %v911 = vpop.f32.mrf.mxu0
    %v912 = vadd.f32 0.0, %v911
    %v913 = vpop.f32.mrf.mxu0
    %v914 = vadd.f32 0.0, %v913
    %v915 = vpop.f32.mrf.mxu0
    %v916 = vpop.f32.mrf.mxu0
    %917 = vdwg.mxu0
    %918 = vmatprep.subr.bf16.mxu0 %v826
    %919 = vmatpush1.bf16.msra.mxu0 %v825
    %920 = vmatprep.subr.bf16.mxu0 %v820
    %921 = vmatpush1.bf16.msra.mxu0 %v819
    %922 = vmatprep.subr.bf16.mxu0 %v814
    %923 = vmatpush1.bf16.msra.mxu0 %v813
    %924 = vmatprep.subr.bf16.mxu0 %v808
    %925 = vmatpush1.bf16.msra.mxu0 %v807
    %926 = vmatprep.subr.bf16.mxu0 %v802
    %927 = vmatpush1.bf16.msra.mxu0 %v801
    %928 = vmatprep.subr.bf16.mxu0 %v796
    %929 = vmatpush1.bf16.msra.mxu0 %v795
    %930 = vmatprep.subr.bf16.mxu0 %v790
    %931 = vmatpush1.bf16.msra.mxu0 %v789
    %932 = vmatprep.subr.bf16.mxu0 %v784
    %933 = vmatpush1.bf16.msra.mxu0 %v783
    %934 = vmatprep.subr.bf16.mxu0 0
    %935 = vmatpush2.bf16.msra.mxu0 0
    %936 = vmatprep.subr.bf16.mxu0 0
    %937 = vmatpush2.bf16.msra.mxu0 0
    %938 = vmatprep.subr.bf16.mxu0 0
    %939 = vmatpush2.bf16.msra.mxu0 0
    %940 = vmatprep.subr.bf16.mxu0 0
    %941 = vmatpush2.bf16.msra.mxu0 0
    %942 = vmatprep.subr.bf16.mxu0 0
    %943 = vmatpush2.bf16.msra.mxu0 0
    %944 = vmatprep.subr.bf16.mxu0 0
    %945 = vmatpush2.bf16.msra.mxu0 0
    %946 = vmatprep.subr.bf16.mxu0 0
    %947 = vmatpush2.bf16.msra.mxu0 0
    %948 = vmatprep.subr.bf16.mxu0 0
    %949 = vmatpush2.bf16.msra.mxu0 0
    %950 = vmatprep.mubr.bf16.mxu0 0
    %951 = vmatmul.mubr.bf16.gmra.mxu0 %v588
    %v952 = vpop.f32.mrf.mxu0
    %v953 = vadd.f32 0.0, %v952
    %v954 = vpop.f32.mrf.mxu0
    %v955 = vadd.f32 0.0, %v954
    %v956 = vpop.f32.mrf.mxu0
    %v957 = vpop.f32.mrf.mxu0
    %958 = vdwg.mxu0
    %959 = vmatprep.subr.bf16.mxu0 %v828
    %960 = vmatpush1.bf16.msra.mxu0 %v827
    %961 = vmatprep.subr.bf16.mxu0 %v822
    %962 = vmatpush1.bf16.msra.mxu0 %v821
    %963 = vmatprep.subr.bf16.mxu0 %v816
    %964 = vmatpush1.bf16.msra.mxu0 %v815
    %965 = vmatprep.subr.bf16.mxu0 %v810
    %966 = vmatpush1.bf16.msra.mxu0 %v809
    %967 = vmatprep.subr.bf16.mxu0 %v804
    %968 = vmatpush1.bf16.msra.mxu0 %v803
    %969 = vmatprep.subr.bf16.mxu0 %v798
    %970 = vmatpush1.bf16.msra.mxu0 %v797
    %971 = vmatprep.subr.bf16.mxu0 %v792
    %972 = vmatpush1.bf16.msra.mxu0 %v791
    %973 = vmatprep.subr.bf16.mxu0 %v786
    %974 = vmatpush1.bf16.msra.mxu0 %v785
    %975 = vmatprep.subr.bf16.mxu0 0
    %976 = vmatpush2.bf16.msra.mxu0 0
    %977 = vmatprep.subr.bf16.mxu0 0
    %978 = vmatpush2.bf16.msra.mxu0 0
    %979 = vmatprep.subr.bf16.mxu0 0
    %980 = vmatpush2.bf16.msra.mxu0 0
    %981 = vmatprep.subr.bf16.mxu0 0
    %982 = vmatpush2.bf16.msra.mxu0 0
    %983 = vmatprep.subr.bf16.mxu0 0
    %984 = vmatpush2.bf16.msra.mxu0 0
    %985 = vmatprep.subr.bf16.mxu0 0
    %986 = vmatpush2.bf16.msra.mxu0 0
    %987 = vmatprep.subr.bf16.mxu0 0
    %988 = vmatpush2.bf16.msra.mxu0 0
    %989 = vmatprep.subr.bf16.mxu0 0
    %990 = vmatpush2.bf16.msra.mxu0 0
    %991 = vmatprep.mubr.bf16.mxu0 0
    %992 = vmatmul.mubr.bf16.gmra.mxu0 %v588
    %v993 = vpop.f32.mrf.mxu0
    %v994 = vadd.f32 0.0, %v993
    %v995 = vpop.f32.mrf.mxu0
    %v996 = vadd.f32 0.0, %v995
    %v997 = vpop.f32.mrf.mxu0
    %v998 = vpop.f32.mrf.mxu0
    %999 = vdwg.mxu0
    %v1000 = vld [vmem:[%s6] sm:$0x3]
    %v1002 = vlaneseq
    %v1003 = vshrl.u32 %v1002, 7
    %v1004 = vsub.s32 0, %v1003
    %v1005 = vrot.slane %v1000, %v1004
    %v1006 = vlaneseq
    %v1007 = vshrl.u32 %v1006, 7
    %v1008 = vsub.s32 1, %v1007
    %v1009 = vrot.slane %v1000, %v1008
    %v1012 = vld [vmem:[%s5] sm:$0xff]
    %v1013 = vld [vmem:[%s5 + $0x8] sm:$0xff]
    %vm1014 = vcmask 64512
    %v1016 = vsel %vm1014, %v1012, 0
    %v1019 = vsel %vm1014, %v1013, 0
    %1021 = vmatprep.subr.mxu0 0.0
    %1022 = vmatpush1.msra.mxu0 0.0
    %1023 = vmatprep.subr.mxu0 0.0
    %1024 = vmatpush1.msra.mxu0 0.0
    %1025 = vmatprep.subr.mxu0 0.0
    %1026 = vmatpush1.msra.mxu0 0.0
    %1027 = vmatprep.subr.mxu0 0.0
    %1028 = vmatpush1.msra.mxu0 0.0
    %1029 = vmatprep.subr.mxu0 0.0
    %1030 = vmatpush1.msra.mxu0 0.0
    %1031 = vmatprep.subr.mxu0 0.0
    %1032 = vmatpush1.msra.mxu0 0.0
    %1033 = vmatprep.subr.mxu0 0.0
    %1034 = vmatpush1.msra.mxu0 0.0
    %1035 = vmatprep.subr.mxu0 0.0
    %1036 = vmatpush1.msra.mxu0 0.0
    %1037 = vmatprep.subr.mxu0 0.0
    %1038 = vmatpush1.msra.mxu0 0.0
    %1039 = vmatprep.subr.mxu0 0.0
    %1040 = vmatpush1.msra.mxu0 0.0
    %1041 = vmatprep.subr.mxu0 0.0
    %1042 = vmatpush1.msra.mxu0 0.0
    %1043 = vmatprep.subr.mxu0 0.0
    %1044 = vmatpush1.msra.mxu0 0.0
    %1045 = vmatprep.subr.mxu0 0.0
    %1046 = vmatpush1.msra.mxu0 0.0
    %1047 = vmatprep.subr.mxu0 0.0
    %1048 = vmatpush1.msra.mxu0 0.0
    %1049 = vmatprep.subr.mxu0 0.0
    %1050 = vmatpush1.msra.mxu0 0.0
    %1051 = vmatprep.subr.mxu0 %v914
    %1052 = vmatpush1.msra.mxu0 %v912
    %1053 = vmatprep.subr.mxu0 0.0
    %1054 = vmatpush2.msra.mxu0 0.0
    %1055 = vmatprep.subr.mxu0 0.0
    %1056 = vmatpush2.msra.mxu0 0.0
    %1057 = vmatprep.subr.mxu0 0.0
    %1058 = vmatpush2.msra.mxu0 0.0
    %1059 = vmatprep.subr.mxu0 0.0
    %1060 = vmatpush2.msra.mxu0 0.0
    %1061 = vmatprep.subr.mxu0 0.0
    %1062 = vmatpush2.msra.mxu0 0.0
    %1063 = vmatprep.subr.mxu0 0.0
    %1064 = vmatpush2.msra.mxu0 0.0
    %1065 = vmatprep.subr.mxu0 0.0
    %1066 = vmatpush2.msra.mxu0 0.0
    %1067 = vmatprep.subr.mxu0 0.0
    %1068 = vmatpush2.msra.mxu0 0.0
    %1069 = vmatprep.subr.mxu0 0.0
    %1070 = vmatpush2.msra.mxu0 0.0
    %1071 = vmatprep.subr.mxu0 0.0
    %1072 = vmatpush2.msra.mxu0 0.0
    %1073 = vmatprep.subr.mxu0 0.0
    %1074 = vmatpush2.msra.mxu0 0.0
    %1075 = vmatprep.subr.mxu0 0.0
    %1076 = vmatpush2.msra.mxu0 0.0
    %1077 = vmatprep.subr.mxu0 0.0
    %1078 = vmatpush2.msra.mxu0 0.0
    %1079 = vmatprep.subr.mxu0 0.0
    %1080 = vmatpush2.msra.mxu0 0.0
    %1081 = vmatprep.subr.mxu0 0.0
    %1082 = vmatpush2.msra.mxu0 0.0
    %1083 = vmatprep.subr.mxu0 0.0
    %1084 = vmatpush2.msra.mxu0 0.0
    %1085 = vmatprep.mubr.f32.mxu0 0.0
    %1086 = vmatmul.mubr.f32.gmra.mxu0 %v1016
    %v1087 = vpop.f32.mrf.mxu0
    %v1088 = vadd.f32 0.0, %v1087
    %v1089 = vpop.f32.mrf.mxu0
    %v1090 = vadd.f32 0.0, %v1089
    %1091 = vmatprep.mubr.f32.mxu0 0.0
    %1092 = vmatmul.mubr.f32.gmra.mxu0 %v1019
    %v1093 = vpop.f32.mrf.mxu0
    %v1094 = vadd.f32 0.0, %v1093
    %v1095 = vpop.f32.mrf.mxu0
    %v1096 = vadd.f32 0.0, %v1095
    %1097 = vdwg.mxu0
    %v1098 = vadd.f32 %v1005, %v1088
    %v1099 = vadd.f32 %v1009, %v1090
    %v1100 = vadd.f32 %v1005, %v1094
    %v1101 = vadd.f32 %v1009, %v1096
    %s1102 = scalar_lea.vmem %s5, 16
    %v1103 = vld [vmem:[%s1102] sm:$0xff]
    %v1104 = vld [vmem:[%s1102 + $0x8] sm:$0xff]
    %v1106 = vsel %vm1014, %v1103, 0
    %v1109 = vsel %vm1014, %v1104, 0
    %1111 = vmatprep.subr.mxu0 0.0
    %1112 = vmatpush1.msra.mxu0 0.0
    %1113 = vmatprep.subr.mxu0 0.0
    %1114 = vmatpush1.msra.mxu0 0.0
    %1115 = vmatprep.subr.mxu0 0.0
    %1116 = vmatpush1.msra.mxu0 0.0
    %1117 = vmatprep.subr.mxu0 0.0
    %1118 = vmatpush1.msra.mxu0 0.0
    %1119 = vmatprep.subr.mxu0 0.0
    %1120 = vmatpush1.msra.mxu0 0.0
    %1121 = vmatprep.subr.mxu0 0.0
    %1122 = vmatpush1.msra.mxu0 0.0
    %1123 = vmatprep.subr.mxu0 0.0
    %1124 = vmatpush1.msra.mxu0 0.0
    %1125 = vmatprep.subr.mxu0 0.0
    %1126 = vmatpush1.msra.mxu0 0.0
    %1127 = vmatprep.subr.mxu0 0.0
    %1128 = vmatpush1.msra.mxu0 0.0
    %1129 = vmatprep.subr.mxu0 0.0
    %1130 = vmatpush1.msra.mxu0 0.0
    %1131 = vmatprep.subr.mxu0 0.0
    %1132 = vmatpush1.msra.mxu0 0.0
    %1133 = vmatprep.subr.mxu0 0.0
    %1134 = vmatpush1.msra.mxu0 0.0
    %1135 = vmatprep.subr.mxu0 0.0
    %1136 = vmatpush1.msra.mxu0 0.0
    %1137 = vmatprep.subr.mxu0 0.0
    %1138 = vmatpush1.msra.mxu0 0.0
    %1139 = vmatprep.subr.mxu0 0.0
    %1140 = vmatpush1.msra.mxu0 0.0
    %1141 = vmatprep.subr.mxu0 %v955
    %1142 = vmatpush1.msra.mxu0 %v953
    %1143 = vmatprep.subr.mxu0 0.0
    %1144 = vmatpush2.msra.mxu0 0.0
    %1145 = vmatprep.subr.mxu0 0.0
    %1146 = vmatpush2.msra.mxu0 0.0
    %1147 = vmatprep.subr.mxu0 0.0
    %1148 = vmatpush2.msra.mxu0 0.0
    %1149 = vmatprep.subr.mxu0 0.0
    %1150 = vmatpush2.msra.mxu0 0.0
    %1151 = vmatprep.subr.mxu0 0.0
    %1152 = vmatpush2.msra.mxu0 0.0
    %1153 = vmatprep.subr.mxu0 0.0
    %1154 = vmatpush2.msra.mxu0 0.0
    %1155 = vmatprep.subr.mxu0 0.0
    %1156 = vmatpush2.msra.mxu0 0.0
    %1157 = vmatprep.subr.mxu0 0.0
    %1158 = vmatpush2.msra.mxu0 0.0
    %1159 = vmatprep.subr.mxu0 0.0
    %1160 = vmatpush2.msra.mxu0 0.0
    %1161 = vmatprep.subr.mxu0 0.0
    %1162 = vmatpush2.msra.mxu0 0.0
    %1163 = vmatprep.subr.mxu0 0.0
    %1164 = vmatpush2.msra.mxu0 0.0
    %1165 = vmatprep.subr.mxu0 0.0
    %1166 = vmatpush2.msra.mxu0 0.0
    %1167 = vmatprep.subr.mxu0 0.0
    %1168 = vmatpush2.msra.mxu0 0.0
    %1169 = vmatprep.subr.mxu0 0.0
    %1170 = vmatpush2.msra.mxu0 0.0
    %1171 = vmatprep.subr.mxu0 0.0
    %1172 = vmatpush2.msra.mxu0 0.0
    %1173 = vmatprep.subr.mxu0 0.0
    %1174 = vmatpush2.msra.mxu0 0.0
    %1175 = vmatprep.mubr.f32.mxu0 0.0
    %1176 = vmatmul.mubr.f32.gmra.mxu0 %v1106
    %v1177 = vpop.f32.mrf.mxu0
    %v1178 = vadd.f32 0.0, %v1177
    %v1179 = vpop.f32.mrf.mxu0
    %v1180 = vadd.f32 0.0, %v1179
    %1181 = vmatprep.mubr.f32.mxu0 0.0
    %1182 = vmatmul.mubr.f32.gmra.mxu0 %v1109
    %v1183 = vpop.f32.mrf.mxu0
    %v1184 = vadd.f32 0.0, %v1183
    %v1185 = vpop.f32.mrf.mxu0
    %v1186 = vadd.f32 0.0, %v1185
    %1187 = vdwg.mxu0
    %v1188 = vadd.f32 %v1098, %v1178
    %v1189 = vadd.f32 %v1099, %v1180
    %v1190 = vadd.f32 %v1100, %v1184
    %v1191 = vadd.f32 %v1101, %v1186
    %s1192 = scalar_lea.vmem %s5, 32
    %v1193 = vld [vmem:[%s1192] sm:$0xff]
    %v1194 = vld [vmem:[%s1192 + $0x8] sm:$0xff]
    %v1196 = vsel %vm1014, %v1193, 0
    %v1199 = vsel %vm1014, %v1194, 0
    %1201 = vmatprep.subr.mxu0 0.0
    %1202 = vmatpush1.msra.mxu0 0.0
    %1203 = vmatprep.subr.mxu0 0.0
    %1204 = vmatpush1.msra.mxu0 0.0
    %1205 = vmatprep.subr.mxu0 0.0
    %1206 = vmatpush1.msra.mxu0 0.0
    %1207 = vmatprep.subr.mxu0 0.0
    %1208 = vmatpush1.msra.mxu0 0.0
    %1209 = vmatprep.subr.mxu0 0.0
    %1210 = vmatpush1.msra.mxu0 0.0
    %1211 = vmatprep.subr.mxu0 0.0
    %1212 = vmatpush1.msra.mxu0 0.0
    %1213 = vmatprep.subr.mxu0 0.0
    %1214 = vmatpush1.msra.mxu0 0.0
    %1215 = vmatprep.subr.mxu0 0.0
    %1216 = vmatpush1.msra.mxu0 0.0
    %1217 = vmatprep.subr.mxu0 0.0
    %1218 = vmatpush1.msra.mxu0 0.0
    %1219 = vmatprep.subr.mxu0 0.0
    %1220 = vmatpush1.msra.mxu0 0.0
    %1221 = vmatprep.subr.mxu0 0.0
    %1222 = vmatpush1.msra.mxu0 0.0
    %1223 = vmatprep.subr.mxu0 0.0
    %1224 = vmatpush1.msra.mxu0 0.0
    %1225 = vmatprep.subr.mxu0 0.0
    %1226 = vmatpush1.msra.mxu0 0.0
    %1227 = vmatprep.subr.mxu0 0.0
    %1228 = vmatpush1.msra.mxu0 0.0
    %1229 = vmatprep.subr.mxu0 0.0
    %1230 = vmatpush1.msra.mxu0 0.0
    %1231 = vmatprep.subr.mxu0 %v996
    %1232 = vmatpush1.msra.mxu0 %v994
    %1233 = vmatprep.subr.mxu0 0.0
    %1234 = vmatpush2.msra.mxu0 0.0
    %1235 = vmatprep.subr.mxu0 0.0
    %1236 = vmatpush2.msra.mxu0 0.0
    %1237 = vmatprep.subr.mxu0 0.0
    %1238 = vmatpush2.msra.mxu0 0.0
    %1239 = vmatprep.subr.mxu0 0.0
    %1240 = vmatpush2.msra.mxu0 0.0
    %1241 = vmatprep.subr.mxu0 0.0
    %1242 = vmatpush2.msra.mxu0 0.0
    %1243 = vmatprep.subr.mxu0 0.0
    %1244 = vmatpush2.msra.mxu0 0.0
    %1245 = vmatprep.subr.mxu0 0.0
    %1246 = vmatpush2.msra.mxu0 0.0
    %1247 = vmatprep.subr.mxu0 0.0
    %1248 = vmatpush2.msra.mxu0 0.0
    %1249 = vmatprep.subr.mxu0 0.0
    %1250 = vmatpush2.msra.mxu0 0.0
    %1251 = vmatprep.subr.mxu0 0.0
    %1252 = vmatpush2.msra.mxu0 0.0
    %1253 = vmatprep.subr.mxu0 0.0
    %1254 = vmatpush2.msra.mxu0 0.0
    %1255 = vmatprep.subr.mxu0 0.0
    %1256 = vmatpush2.msra.mxu0 0.0
    %1257 = vmatprep.subr.mxu0 0.0
    %1258 = vmatpush2.msra.mxu0 0.0
    %1259 = vmatprep.subr.mxu0 0.0
    %1260 = vmatpush2.msra.mxu0 0.0
    %1261 = vmatprep.subr.mxu0 0.0
    %1262 = vmatpush2.msra.mxu0 0.0
    %1263 = vmatprep.subr.mxu0 0.0
    %1264 = vmatpush2.msra.mxu0 0.0
    %1265 = vmatprep.mubr.f32.mxu0 0.0
    %1266 = vmatmul.mubr.f32.gmra.mxu0 %v1196
    %v1267 = vpop.f32.mrf.mxu0
    %v1268 = vadd.f32 0.0, %v1267
    %v1269 = vpop.f32.mrf.mxu0
    %v1270 = vadd.f32 0.0, %v1269
    %1271 = vmatprep.mubr.f32.mxu0 0.0
    %1272 = vmatmul.mubr.f32.gmra.mxu0 %v1199
    %v1273 = vpop.f32.mrf.mxu0
    %v1274 = vadd.f32 0.0, %v1273
    %v1275 = vpop.f32.mrf.mxu0
    %v1276 = vadd.f32 0.0, %v1275
    %1277 = vdwg.mxu0
    %v1278 = vadd.f32 %v1188, %v1268
    %v1279 = vadd.f32 %v1189, %v1270
    %v1280 = vadd.f32 %v1190, %v1274
    %v1281 = vadd.f32 %v1191, %v1276
    %v1282 = vmul.f32 %v1278, 0.5
    %v1283 = vmul.f32 %v1279, 0.5
    %v1284 = vmul.f32 %v1280, 0.5
    %v1285 = vmul.f32 %v1281, 0.5
    %v1286 = vmul.f32 %v1278, 0.044715
    %v1287 = vmul.f32 %v1279, 0.044715
    %v1288 = vmul.f32 %v1280, 0.044715
    %v1289 = vmul.f32 %v1281, 0.044715
    %v1290 = vmul.f32 %v1286, %v1278
    %v1291 = vmul.f32 %v1287, %v1279
    %v1292 = vmul.f32 %v1288, %v1280
    %v1293 = vmul.f32 %v1289, %v1281
    %v1294 = vmul.f32 %v1290, %v1278
    %v1295 = vmul.f32 %v1291, %v1279
    %v1296 = vmul.f32 %v1292, %v1280
    %v1297 = vmul.f32 %v1293, %v1281
    %v1298 = vadd.f32 %v1278, %v1294
    %v1299 = vadd.f32 %v1279, %v1295
    %v1300 = vadd.f32 %v1280, %v1296
    %v1301 = vadd.f32 %v1281, %v1297
    %v1302 = vmul.f32 %v1298, 0.7978846
    %v1303 = vmul.f32 %v1299, 0.7978846
    %v1304 = vmul.f32 %v1300, 0.7978846
    %v1305 = vmul.f32 %v1301, 0.7978846
    %v1306 = vtanh.pop %v1302
    %v1307 = vtanh.pop %v1303
    %v1308 = vtanh.pop %v1304
    %v1309 = vtanh.pop %v1305
    %v1310 = vadd.f32 %v1306, 1.0
    %v1311 = vadd.f32 %v1307, 1.0
    %v1312 = vadd.f32 %v1308, 1.0
    %v1313 = vadd.f32 %v1309, 1.0
    %v1314 = vmul.f32 %v1282, %v1310
    %v1315 = vmul.f32 %v1283, %v1311
    %v1316 = vmul.f32 %v1284, %v1312
    %v1317 = vmul.f32 %v1285, %v1313
    %v1318 = vld [vmem:[%s7] sm:$0xf]
    %v1319 = vld [vmem:[%s7 + $0x4] sm:$0xf]
    %v1320 = vld [vmem:[%s7 + $0x8] sm:$0xf]
    %v1321 = vld [vmem:[%s7 + $0xc] sm:$0xf]
    %v1322 = vld [vmem:[%s7 + $0x10] sm:$0xf]
    %v1323 = vld [vmem:[%s7 + $0x14] sm:$0xf]
    %v1324 = vld [vmem:[%s7 + $0x18] sm:$0xf]
    %v1325 = vld [vmem:[%s7 + $0x1c] sm:$0xf]
    %v1326 = vld [vmem:[%s7 + $0x20] sm:$0xf]
    %v1327 = vld [vmem:[%s7 + $0x24] sm:$0xf]
    %v1328 = vld [vmem:[%s7 + $0x28] sm:$0xf]
    %v1329 = vld [vmem:[%s7 + $0x2c] sm:$0xf]
    %v1330 = vld [vmem:[%s7 + $0x30] sm:$0xf]
    %v1331 = vld [vmem:[%s7 + $0x34] sm:$0xf]
    %v1332 = vld [vmem:[%s7 + $0x38] sm:$0xf]
    %v1333 = vld [vmem:[%s7 + $0x3c] sm:$0xf]
    %v1334 = vpack.c.bf16 %v1316, %v1314
    %v1335 = vpack.c.bf16 %v1317, %v1315
    %v1336 = vld [vmem:[#allocation8] sm:$0xf]
    %v1337 = vld [vmem:[#allocation8 + $0x4] sm:$0xf]
    %v1338 = vld [vmem:[#allocation8 + $0x8] sm:$0xf]
    %v1339 = vld [vmem:[#allocation8 + $0xc] sm:$0xf]
    %v1340 = vld [vmem:[#allocation8 + $0x10] sm:$0xf]
    %v1341 = vld [vmem:[#allocation8 + $0x14] sm:$0xf]
    %v1342 = vld [vmem:[#allocation8 + $0x18] sm:$0xf]
    %v1343 = vld [vmem:[#allocation8 + $0x1c] sm:$0xf]
    %v1344 = vld [vmem:[#allocation8 + $0x20] sm:$0xf]
    %v1345 = vld [vmem:[#allocation8 + $0x24] sm:$0xf]
    %v1346 = vld [vmem:[#allocation8 + $0x28] sm:$0xf]
    %v1347 = vld [vmem:[#allocation8 + $0x2c] sm:$0xf]
    %v1348 = vld [vmem:[#allocation8 + $0x30] sm:$0xf]
    %v1349 = vld [vmem:[#allocation8 + $0x34] sm:$0xf]
    %v1350 = vld [vmem:[#allocation8 + $0x38] sm:$0xf]
    %v1351 = vld [vmem:[#allocation8 + $0x3c] sm:$0xf]
    %v1352 = vld [vmem:[#allocation8 + $0x40] sm:$0xf]
    %v1353 = vld [vmem:[#allocation8 + $0x44] sm:$0xf]
    %v1354 = vld [vmem:[#allocation8 + $0x48] sm:$0xf]
    %v1355 = vld [vmem:[#allocation8 + $0x4c] sm:$0xf]
    %v1356 = vld [vmem:[#allocation8 + $0x50] sm:$0xf]
    %v1357 = vld [vmem:[#allocation8 + $0x54] sm:$0xf]
    %v1358 = vld [vmem:[#allocation8 + $0x58] sm:$0xf]
    %v1359 = vld [vmem:[#allocation8 + $0x5c] sm:$0xf]
    %v1360 = vld [vmem:[#allocation8 + $0x60] sm:$0xf]
    %v1361 = vld [vmem:[#allocation8 + $0x64] sm:$0xf]
    %v1362 = vld [vmem:[#allocation8 + $0x68] sm:$0xf]
    %v1363 = vld [vmem:[#allocation8 + $0x6c] sm:$0xf]
    %v1364 = vld [vmem:[#allocation8 + $0x70] sm:$0xf]
    %v1365 = vld [vmem:[#allocation8 + $0x74] sm:$0xf]
    %v1366 = vld [vmem:[#allocation8 + $0x78] sm:$0xf]
    %v1367 = vld [vmem:[#allocation8 + $0x7c] sm:$0xf]
    %v1400 = vunpack.c.l.b16 %v1336
    %v1401 = vunpack.c.l.b16 %v1337
    %v1402 = vunpack.c.l.b16 %v1338
    %v1403 = vunpack.c.l.b16 %v1339
    %v1404 = vunpack.c.l.b16 %v1340
    %v1405 = vunpack.c.l.b16 %v1341
    %v1406 = vunpack.c.l.b16 %v1342
    %v1407 = vunpack.c.l.b16 %v1343
    %v1408 = vunpack.c.l.b16 %v1344
    %v1409 = vunpack.c.l.b16 %v1345
    %v1410 = vunpack.c.l.b16 %v1346
    %v1411 = vunpack.c.l.b16 %v1347
    %v1412 = vunpack.c.l.b16 %v1348
    %v1413 = vunpack.c.l.b16 %v1349
    %v1414 = vunpack.c.l.b16 %v1350
    %v1415 = vunpack.c.l.b16 %v1351
    %v1416 = vunpack.c.l.b16 %v1352
    %v1417 = vunpack.c.l.b16 %v1353
    %v1418 = vunpack.c.l.b16 %v1354
    %v1419 = vunpack.c.l.b16 %v1355
    %v1420 = vunpack.c.l.b16 %v1356
    %v1421 = vunpack.c.l.b16 %v1357
    %v1422 = vunpack.c.l.b16 %v1358
    %v1423 = vunpack.c.l.b16 %v1359
    %v1424 = vunpack.c.l.b16 %v1360
    %v1425 = vunpack.c.l.b16 %v1361
    %v1426 = vunpack.c.l.b16 %v1362
    %v1427 = vunpack.c.l.b16 %v1363
    %v1428 = vunpack.c.l.b16 %v1364
    %v1429 = vunpack.c.l.b16 %v1365
    %v1430 = vunpack.c.l.b16 %v1366
    %v1431 = vunpack.c.l.b16 %v1367
    %v1432 = vpack.c.b16 %v1401, %v1400
    %v1433 = vpack.c.b16 %v1403, %v1402
    %v1434 = vpack.c.b16 %v1405, %v1404
    %v1435 = vpack.c.b16 %v1407, %v1406
    %v1436 = vpack.c.b16 %v1409, %v1408
    %v1437 = vpack.c.b16 %v1411, %v1410
    %v1438 = vpack.c.b16 %v1413, %v1412
    %v1439 = vpack.c.b16 %v1415, %v1414
    %v1440 = vpack.c.b16 %v1417, %v1416
    %v1441 = vpack.c.b16 %v1419, %v1418
    %v1442 = vpack.c.b16 %v1421, %v1420
    %v1443 = vpack.c.b16 %v1423, %v1422
    %v1444 = vpack.c.b16 %v1425, %v1424
    %v1445 = vpack.c.b16 %v1427, %v1426
    %v1446 = vpack.c.b16 %v1429, %v1428
    %v1447 = vpack.c.b16 %v1431, %v1430
    %1464 = vmatprep.subr.bf16.mxu0 0
    %1465 = vmatpush1.bf16.msra.mxu0 %v1439
    %1466 = vmatprep.subr.bf16.mxu0 0
    %1467 = vmatpush1.bf16.msra.mxu0 %v1438
    %1468 = vmatprep.subr.bf16.mxu0 0
    %1469 = vmatpush1.bf16.msra.mxu0 %v1437
    %1470 = vmatprep.subr.bf16.mxu0 0
    %1471 = vmatpush1.bf16.msra.mxu0 %v1436
    %1472 = vmatprep.subr.bf16.mxu0 0
    %1473 = vmatpush1.bf16.msra.mxu0 %v1435
    %1474 = vmatprep.subr.bf16.mxu0 0
    %1475 = vmatpush1.bf16.msra.mxu0 %v1434
    %1476 = vmatprep.subr.bf16.mxu0 0
    %1477 = vmatpush1.bf16.msra.mxu0 %v1433
    %1478 = vmatprep.subr.bf16.mxu0 0
    %1479 = vmatpush1.bf16.msra.mxu0 %v1432
    %1480 = vmatprep.subr.bf16.mxu0 0
    %1481 = vmatpush2.bf16.msra.mxu0 %v1447
    %1482 = vmatprep.subr.bf16.mxu0 0
    %1483 = vmatpush2.bf16.msra.mxu0 %v1446
    %1484 = vmatprep.subr.bf16.mxu0 0
    %1485 = vmatpush2.bf16.msra.mxu0 %v1445
    %1486 = vmatprep.subr.bf16.mxu0 0
    %1487 = vmatpush2.bf16.msra.mxu0 %v1444
    %1488 = vmatprep.subr.bf16.mxu0 0
    %1489 = vmatpush2.bf16.msra.mxu0 %v1443
    %1490 = vmatprep.subr.bf16.mxu0 0
    %1491 = vmatpush2.bf16.msra.mxu0 %v1442
    %1492 = vmatprep.subr.bf16.mxu0 0
    %1493 = vmatpush2.bf16.msra.mxu0 %v1441
    %1494 = vmatprep.subr.bf16.mxu0 0
    %1495 = vmatpush2.bf16.msra.mxu0 %v1440
    %1496 = vmatprep.mubr.bf16.mxu0 %v1335
    %1497 = vmatmul.mubr.bf16.gmra.mxu0 %v1334
    %v1498 = vpop.f32.mrf.mxu0
    %v1499 = vadd.f32 0.0, %v1498
    %v1500 = vpop.f32.mrf.mxu0
    %v1501 = vpop.f32.mrf.mxu0
    %v1502 = vadd.f32 0.0, %v1501
    %v1503 = vpop.f32.mrf.mxu0
    %1504 = vdwg.mxu0
    %v1521 = vunpack.c.l.b16 %v1318
    %v1522 = vunpack.c.l.b16 %v1319
    %v1523 = vunpack.c.l.b16 %v1320
    %v1524 = vunpack.c.l.b16 %v1321
    %v1525 = vunpack.c.l.b16 %v1322
    %v1526 = vunpack.c.l.b16 %v1323
    %v1527 = vunpack.c.l.b16 %v1324
    %v1528 = vunpack.c.l.b16 %v1325
    %v1529 = vunpack.c.l.b16 %v1326
    %v1530 = vunpack.c.l.b16 %v1327
    %v1531 = vunpack.c.l.b16 %v1328
    %v1532 = vunpack.c.l.b16 %v1329
    %v1533 = vunpack.c.l.b16 %v1330
    %v1534 = vunpack.c.l.b16 %v1331
    %v1535 = vunpack.c.l.b16 %v1332
    %v1536 = vunpack.c.l.b16 %v1333
    %v1537 = vpack.c.b16 %v1522, %v1521
    %v1538 = vpack.c.b16 %v1524, %v1523
    %v1539 = vpack.c.b16 %v1526, %v1525
    %v1540 = vpack.c.b16 %v1528, %v1527
    %v1541 = vpack.c.b16 %v1530, %v1529
    %v1542 = vpack.c.b16 %v1532, %v1531
    %v1543 = vpack.c.b16 %v1534, %v1533
    %v1544 = vpack.c.b16 %v1536, %v1535
    %1553 = vmatprep.subr.bf16.mxu0 0
    %1554 = vmatpush1.bf16.msra.mxu0 %v1544
    %1555 = vmatprep.subr.bf16.mxu0 0
    %1556 = vmatpush1.bf16.msra.mxu0 %v1543
    %1557 = vmatprep.subr.bf16.mxu0 0
    %1558 = vmatpush1.bf16.msra.mxu0 %v1542
    %1559 = vmatprep.subr.bf16.mxu0 0
    %1560 = vmatpush1.bf16.msra.mxu0 %v1541
    %1561 = vmatprep.subr.bf16.mxu0 0
    %1562 = vmatpush1.bf16.msra.mxu0 %v1540
    %1563 = vmatprep.subr.bf16.mxu0 0
    %1564 = vmatpush1.bf16.msra.mxu0 %v1539
    %1565 = vmatprep.subr.bf16.mxu0 0
    %1566 = vmatpush1.bf16.msra.mxu0 %v1538
    %1567 = vmatprep.subr.bf16.mxu0 0
    %1568 = vmatpush1.bf16.msra.mxu0 %v1537
    %1569 = vmatprep.subr.bf16.mxu0 0
    %1570 = vmatpush2.bf16.msra.mxu0 0
    %1571 = vmatprep.subr.bf16.mxu0 0
    %1572 = vmatpush2.bf16.msra.mxu0 0
    %1573 = vmatprep.subr.bf16.mxu0 0
    %1574 = vmatpush2.bf16.msra.mxu0 0
    %1575 = vmatprep.subr.bf16.mxu0 0
    %1576 = vmatpush2.bf16.msra.mxu0 0
    %1577 = vmatprep.subr.bf16.mxu0 0
    %1578 = vmatpush2.bf16.msra.mxu0 0
    %1579 = vmatprep.subr.bf16.mxu0 0
    %1580 = vmatpush2.bf16.msra.mxu0 0
    %1581 = vmatprep.subr.bf16.mxu0 0
    %1582 = vmatpush2.bf16.msra.mxu0 0
    %1583 = vmatprep.subr.bf16.mxu0 0
    %1584 = vmatpush2.bf16.msra.mxu0 0
    %1585 = vmatprep.mubr.bf16.mxu0 0
    %1586 = vmatmul.mubr.bf16.gmra.mxu0 %v130
    %v1587 = vpop.f32.mrf.mxu0
    %v1588 = vadd.f32 %v1499, %v1587
    %v1589 = vpop.f32.mrf.mxu0
    %v1590 = vpop.f32.mrf.mxu0
    %v1591 = vadd.f32 %v1502, %v1590
    %v1592 = vpop.f32.mrf.mxu0
    %1593 = vdwg.mxu0
    %v1594 = vld [vmem:[%s9] sm:$0x1]
    %v1596 = vlaneseq
    %v1597 = vshrl.u32 %v1596, 7
    %v1598 = vsub.s32 0, %v1597
    %v1599 = vrot.slane %v1594, %v1598
    %v1601 = vadd.f32 %v1588, %v1599
    %v1602 = vadd.f32 %v1591, %v1599
    %1603 = vst [vmem:[#allocation10] sm:$0xff] %v1601
    %1604 = vst [vmem:[#allocation10 + $0x8] sm:$0xff] %v1602
    // Predicated region
    $region58: #{tpu_custom_call.1} parent=1 // pred_check
      _
    $region59: #{tpu_custom_call.1} parent=1 // pred_check_branch
      %1606 = sbr.rel (0) target = $region61
    $region60: #{tpu_custom_call.1} parent=1 // pred_region
      %s1608 = ssub.s32 256, 256
      %1609 = vsyncadd [#allocation4], %s1608
      %s1610 = sshll.u32 [#allocation10], 4
      %s1611 = int_to_ptr.vmem [resolvable:$true] %s1610
      %1616 = dma.vmem_to_hbm [thread:$0]  %s1611, 256, %s10, [#allocation4], 128, 128, 8
    $region61: #{tpu_custom_call.1} parent=1 // pred_fallthru
      _
    // Predicated region
    $region62: #{tpu_custom_call.1} parent=1 // pred_check
      _
    $region63: #{tpu_custom_call.1} parent=1 // pred_check_branch
      %1618 = sbr.rel (0) target = $region65
    $region64: #{tpu_custom_call.1} parent=1 // pred_region
      %1619 = dma.done [#allocation4], 256
    $region65: #{tpu_custom_call.1} parent=1 // pred_fallthru
      _
    %1620 = vsyncpa [#allocation3], 1
    %1621 = vsyncpa [#allocation6], 1
    %1622 = vsyncpa [#allocation9], 1
    %1623 = vsyncpa [#allocation4], 1

</llo_original>
